<compile_context>
chip_gen: v7x
topology: tpu7x:2x2x1
jax: 0.10.0
libtpu: 0.0.40
codegen_flags: <defaults>
</compile_context>

<pallas_src>
import math

import jax
import jax.numpy as jnp
import numpy as np
from jax import lax
from jax.experimental import pallas as pl
from jax.experimental.pallas import tpu as pltpu


# ----------------------------- helpers ---------------------------------------
def _round_up(n, m):
    return ((n + m - 1) // m) * m


def _pad2d(a, rows, cols):
    r, c = a.shape
    if r == rows and c == cols:
        return a
    return jnp.pad(a, ((0, rows - r), (0, cols - c)))


_VMEM_BUDGET = 24 * 1024 * 1024   # working-set target (fits every generation)
_VMEM_LIMIT = 48 * 1024 * 1024    # requested scoped limit (< v7x 64 MiB physical)


def _vmem_bytes(bb, tile_t, in_dim, hidp, outp):
    io = 2 * tile_t * bb * (in_dim + outp)                       # x / out (2-buf)
    weights = 2 * (in_dim * hidp + hidp + hidp * outp + outp)    # 2-buf (see TODO)
    scratch = tile_t * bb * hidp + 2 * bb * (hidp + outp)        # h1/spikes + state
    return 4 * (io + weights + scratch)


def _choose_tiles(B, T, in_dim, hidp, outp, target_rows=256):
    """Pick (bb, tile_t): bb % 8 == 0, bb*tile_t -> target_rows, VMEM-bounded."""
    tile_t = min(_round_up(max(T, 1), 8), 32)
    bb = _round_up(min(max(B, 1), max(8, target_rows // tile_t)), 8)
    # v7x has 2 TensorCores; only the 'parallel' batch axis splits across them.
    while _round_up(B, bb) // bb < 2 and bb > 8:
        bb = max(8, _round_up(bb // 2, 8))
    # Shrink the chunk until the working set fits comfortably in scoped VMEM.
    while _vmem_bytes(bb, tile_t, in_dim, hidp, outp) > _VMEM_BUDGET and tile_t > 8:
        tile_t = max(8, tile_t // 2)
    while _vmem_bytes(bb, tile_t, in_dim, hidp, outp) > _VMEM_BUDGET and bb > 8:
        bb = max(8, bb // 2)
    return bb, tile_t


# ----------------------------- fused kernel ----------------------------------
def make_fused_lif_kernel(bb, tile_t, in_dim, hid, out_dim,
                          alpha1, beta1, alpha2, beta2, threshold):
    """Fused fc1(spike) -> fc2(mem) LIF network over one (tile_t, bb) time chunk."""
    unroll = tile_t <= 8  # full unroll only for short loops (reviewer guidance)

    def kernel(x_ref, w1_ref, b1_ref, w2_ref, b2_ref, out_ref,
               syn1_ref, mem1_ref, syn2_ref, mem2_ref, hs_ref):
        c = pl.program_id(1)  # time-chunk index (sequential / 'arbitrary')

        # reset_states=True: zero all state at the first time chunk of every
        # batch block (time is the innermost grid axis).
        @pl.when(c == 0)
        def _():
            syn1_ref[...] = jnp.zeros_like(syn1_ref)
            mem1_ref[...] = jnp.zeros_like(mem1_ref)
            syn2_ref[...] = jnp.zeros_like(syn2_ref)
            mem2_ref[...] = jnp.zeros_like(mem2_ref)

        # ---------------- fc1: one hoisted MXU matmul per chunk --------------
        # x block is time-major (tile_t, bb, IN); merging leading dims is
        # layout-preserving because bb % 8 == 0.
        x2d = x_ref[...].reshape(tile_t * bb, in_dim)
        h1 = jnp.dot(x2d, w1_ref[...],
                     preferred_element_type=jnp.float32) + b1_ref[...]
        hs_ref[...] = h1.reshape(tile_t, bb, hid)   # stage in VMEM (time-major)

        # fc1 elementwise recurrence (VPU only).  Each step does a full-tile
        # load of hs_ref[t] and a full-tile store of the spikes written back
        # in place over the consumed pre-activation row.
        def fc1_step(t, carry):
            syn1, mem1 = carry
            syn1 = alpha1 * syn1 + hs_ref[t]
            mem1 = beta1 * mem1 + syn1
            fired = mem1 > threshold
            hs_ref[t] = jnp.where(fired, 1.0, 0.0)      # hidden spikes (dense vst)
            return syn1, jnp.where(fired, 0.0, mem1)    # reset-to-zero

        syn1, mem1 = lax.fori_loop(0, tile_t, fc1_step,
                                   (syn1_ref[...], mem1_ref[...]),
                                   unroll=unroll)
        syn1_ref[...] = syn1
        mem1_ref[...] = mem1

        # ---------------- fc2: one hoisted MXU matmul per chunk --------------
        # Pre-activations are staged directly in the (time-major) output block;
        # the recurrence below overwrites each row with the recorded membrane.
        h2 = jnp.dot(hs_ref[...].reshape(tile_t * bb, hid), w2_ref[...],
                     preferred_element_type=jnp.float32) + b2_ref[...]
        out_ref[...] = h2.reshape(tile_t, bb, out_dim)

        def fc2_step(t, carry):
            syn2, mem2 = carry
            syn2 = alpha2 * syn2 + out_ref[t]
            mem2 = beta2 * mem2 + syn2
            out_ref[t] = mem2                           # membrane BEFORE reset
            return syn2, jnp.where(mem2 > threshold, 0.0, mem2)

        syn2, mem2 = lax.fori_loop(0, tile_t, fc2_step,
                                   (syn2_ref[...], mem2_ref[...]),
                                   unroll=unroll)
        syn2_ref[...] = syn2
        mem2_ref[...] = mem2

    return kernel


# ----------------------------- wrapper ----------------------------------------
def lif_network_forward(x_btf, params, *, tau_mem=0.002, tau_syn=0.001,
                        dt=0.001, threshold=1.0):
    """Full LIFNetwork.forward.  x_btf: (B, T, input_size) -> (B, T, output_size)."""
    x = x_btf.astype(jnp.float32)
    B, T, IN = x.shape
    HID = params["w1"].shape[1]
    OUT = params["w2"].shape[1]

    # fc2 hard-codes tau_mem=0.01 in the reference module.
    alpha1 = float(math.exp(-dt / tau_syn))
    beta1 = float(math.exp(-dt / tau_mem))
    alpha2 = float(math.exp(-dt / tau_syn))
    beta2 = float(math.exp(-dt / 0.01))

    # Lane-pad hidden / output feature dims to multiples of 128 so every store
    # is unmasked; padded units have zero weight & bias -> exactly zero activity.
    HIDP = _round_up(HID, 128)
    OUTP = _round_up(OUT, 128)
    w1 = _pad2d(params["w1"].astype(jnp.float32), IN, HIDP)
    b1 = _pad2d(params["b1"].astype(jnp.float32), 1, HIDP)
    w2 = _pad2d(params["w2"].astype(jnp.float32), HIDP, OUTP)
    b2 = _pad2d(params["b2"].astype(jnp.float32), 1, OUTP)

    bb, tile_t = _choose_tiles(B, T, IN, HIDP, OUTP)
    B_pad = _round_up(B, bb)
    T_pad = _round_up(T, tile_t)

    # Time-major HBM layout: one XLA transpose outside the kernel buys dense
    # per-timestep tiles for every load/store inside the recurrence.
    x_tm = jnp.transpose(x, (1, 0, 2))
    if (T_pad != T) or (B_pad != B):
        x_tm = jnp.pad(x_tm, ((0, T_pad - T), (0, B_pad - B), (0, 0)))

    grid = (B_pad // bb, T_pad // tile_t)

    kernel = make_fused_lif_kernel(bb, tile_t, IN, HIDP, OUTP,
                                   alpha1, beta1, alpha2, beta2, threshold)

    out_tm = pl.pallas_call(
        kernel,
        out_shape=jax.ShapeDtypeStruct((T_pad, B_pad, OUTP), jnp.float32),
        grid_spec=pltpu.PrefetchScalarGridSpec(
            num_scalar_prefetch=0,
            grid=grid,
            in_specs=[
                pl.BlockSpec((tile_t, bb, IN), lambda b, c: (c, b, 0)),   # x chunk
                pl.BlockSpec((IN, HIDP), lambda b, c: (0, 0)),            # W1 (resident)
                pl.BlockSpec((1, HIDP), lambda b, c: (0, 0)),             # b1 (resident)
                pl.BlockSpec((HIDP, OUTP), lambda b, c: (0, 0)),          # W2 (resident)
                pl.BlockSpec((1, OUTP), lambda b, c: (0, 0)),             # b2 (resident)
            ],
            out_specs=pl.BlockSpec((tile_t, bb, OUTP), lambda b, c: (c, b, 0)),
            scratch_shapes=[
                pltpu.VMEM((bb, HIDP), jnp.float32),           # syn1
                pltpu.VMEM((bb, HIDP), jnp.float32),           # mem1
                pltpu.VMEM((bb, OUTP), jnp.float32),           # syn2
                pltpu.VMEM((bb, OUTP), jnp.float32),           # mem2
                pltpu.VMEM((tile_t, bb, HIDP), jnp.float32),   # h1 -> spikes (in place)
            ],
        ),
        compiler_params=pltpu.CompilerParams(
            dimension_semantics=("parallel", "arbitrary"),     # batch ||, time seq
            vmem_limit_bytes=_VMEM_LIMIT),
    )(x_tm, w1, b1, w2, b2)

    return jnp.transpose(out_tm[:T, :B, :OUT], (1, 0, 2))


# ----------------------- pure-JAX reference (for checking) --------------------
def lif_layer_ref(x_tbf, w, b, *, tau_mem, tau_syn, dt,
                  threshold=1.0, monitor="spike"):
    alpha = math.exp(-dt / tau_syn)
    beta_m = math.exp(-dt / tau_mem)
    T, B, _ = x_tbf.shape
    OUT = w.shape[1]

    def step(carry, x_t):
        syn, mem = carry
        h = x_t @ w + b[0]
        syn = alpha * syn + h
        mem = beta_m * mem + syn
        spk = (mem > threshold).astype(jnp.float32)
        out = mem if monitor == "mem" else spk
        return (syn, mem * (1.0 - spk)), out

    init = (jnp.zeros((B, OUT), jnp.float32), jnp.zeros((B, OUT), jnp.float32))
    _, outs = jax.lax.scan(step, init, x_tbf)
    return outs


def lif_network_ref(x_btf, params, *, tau_mem=0.002, tau_syn=0.001, dt=0.001):
    x_tbf = jnp.transpose(x_btf, (1, 0, 2)).astype(jnp.float32)
    s1 = lif_layer_ref(x_tbf, params["w1"], params["b1"],
                       tau_mem=tau_mem, tau_syn=tau_syn, dt=dt,
                       monitor="spike")
    m2 = lif_layer_ref(s1, params["w2"], params["b2"],
                       tau_mem=0.01, tau_syn=tau_syn, dt=dt, monitor="mem")
    return jnp.transpose(m2, (1, 0, 2))


# ----------------------------- parameter init ----------------------------------
def init_params(key, input_size, hidden_size, output_size):
    """Deterministic init mimicking torch.nn.Linear defaults: U(-1/sqrt(fan_in), +)."""
    k1, k2, k3, k4 = jax.random.split(key, 4)
    lim1 = 1.0 / math.sqrt(input_size)
    lim2 = 1.0 / math.sqrt(hidden_size)
    return {
        "w1": jax.random.uniform(k1, (input_size, hidden_size), jnp.float32,
                                 -lim1, lim1),
        "b1": jax.random.uniform(k2, (1, hidden_size), jnp.float32, -lim1, lim1),
        "w2": jax.random.uniform(k3, (hidden_size, output_size), jnp.float32,
                                 -lim2, lim2),
        "b2": jax.random.uniform(k4, (1, output_size), jnp.float32, -lim2, lim2),
    }


if __name__ == "__main__":
    input_size, hidden_size, output_size = 16, 32, 4

    key = jax.random.PRNGKey(0)
    pkey, xkey1, xkey2 = jax.random.split(key, 3)
    params = init_params(pkey, input_size, hidden_size, output_size)

    # Config 1: the small spec shapes (single chunk). Inputs scaled so fc1 spikes.
    x1 = 4.0 * jax.random.normal(xkey1, (2, 8, input_size), jnp.float32)
    out1 = jax.block_until_ready(lif_network_forward(x1, params))
    ref1 = jax.block_until_ready(lif_network_ref(x1, params))
    np.testing.assert_allclose(np.asarray(out1), np.asarray(ref1),
                               rtol=1e-5, atol=1e-5)
    assert out1.shape == (2, 8, output_size)

    # Config 2: exercises state carry across time chunks, batch/time padding and
    # the multi-block (megacore-parallel) batch axis.
    x2 = 4.0 * jax.random.normal(xkey2, (10, 40, input_size), jnp.float32)
    out2 = jax.block_until_ready(lif_network_forward(x2, params))
    ref2 = jax.block_until_ready(lif_network_ref(x2, params))
    np.testing.assert_allclose(np.asarray(out2), np.asarray(ref2),
                               rtol=1e-5, atol=1e-5)
    assert out2.shape == (10, 40, output_size)

    print("KERNEL_OK")
</pallas_src>

<mosaic_0001>
module attributes {stable_mosaic.version = 11 : i64} {
  func.func @kernel(%arg0: i32, %arg1: i32, %arg2: memref<8x8x16xf32, #tpu.memory_space<vmem>>, %arg3: memref<16x128xf32, #tpu.memory_space<vmem>>, %arg4: memref<1x128xf32, #tpu.memory_space<vmem>>, %arg5: memref<128x128xf32, #tpu.memory_space<vmem>>, %arg6: memref<1x128xf32, #tpu.memory_space<vmem>>, %arg7: memref<8x8x128xf32, #tpu.memory_space<vmem>>, %arg8: memref<8x128xf32, #tpu.memory_space<vmem>>, %arg9: memref<8x128xf32, #tpu.memory_space<vmem>>, %arg10: memref<8x128xf32, #tpu.memory_space<vmem>>, %arg11: memref<8x128xf32, #tpu.memory_space<vmem>>, %arg12: memref<8x8x128xf32, #tpu.memory_space<vmem>>) attributes {dimension_semantics = [#tpu.dimension_semantics<parallel>, #tpu.dimension_semantics<arbitrary>], iteration_bounds = array<i64: 1, 1>, scalar_prefetch = 0 : i64, scratch_operands = 5 : i64, tpu.core_type = #tpu.core_type<tc>, window_params = [{transform_indices = @transform_0, window_bounds = array<i64: 8, 8, 16>}, {pipeline_mode = #tpu.pipeline_mode<synchronous>, transform_indices = @transform_1, window_bounds = array<i64: 16, 128>}, {pipeline_mode = #tpu.pipeline_mode<synchronous>, transform_indices = @transform_2, window_bounds = array<i64: 1, 128>}, {pipeline_mode = #tpu.pipeline_mode<synchronous>, transform_indices = @transform_3, window_bounds = array<i64: 128, 128>}, {pipeline_mode = #tpu.pipeline_mode<synchronous>, transform_indices = @transform_4, window_bounds = array<i64: 1, 128>}, {transform_indices = @transform_5, window_bounds = array<i64: 8, 8, 128>}]} {
    %c0_i32 = arith.constant 0 : i32
    %0 = arith.cmpi eq, %arg1, %c0_i32 : i32
    %1 = arith.extui %0 : i1 to i32
    %c0_i32_0 = arith.constant 0 : i32
    %2 = arith.cmpi ne, %1, %c0_i32_0 : i32
    scf.if %2 {
      %cst_191 = arith.constant 0.000000e+00 : f32
      %325 = vector.broadcast %cst_191 : f32 to vector<8x128xf32>
      %c0_192 = arith.constant 0 : index
      %c0_193 = arith.constant 0 : index
      %326 = vector.load %arg8[%c0_192, %c0_193] : memref<8x128xf32, #tpu.memory_space<vmem>>, vector<8x128xf32>
      tpu.vector_store %arg8[%c0_192, %c0_193], %325 {strides = array<i32>} : memref<8x128xf32, #tpu.memory_space<vmem>>, vector<8x128xf32>,
      %cst_194 = arith.constant 0.000000e+00 : f32
      %327 = vector.broadcast %cst_194 : f32 to vector<8x128xf32>
      %c0_195 = arith.constant 0 : index
      %c0_196 = arith.constant 0 : index
      %328 = vector.load %arg9[%c0_195, %c0_196] : memref<8x128xf32, #tpu.memory_space<vmem>>, vector<8x128xf32>
      tpu.vector_store %arg9[%c0_195, %c0_196], %327 {strides = array<i32>} : memref<8x128xf32, #tpu.memory_space<vmem>>, vector<8x128xf32>,
      %cst_197 = arith.constant 0.000000e+00 : f32
      %329 = vector.broadcast %cst_197 : f32 to vector<8x128xf32>
      %c0_198 = arith.constant 0 : index
      %c0_199 = arith.constant 0 : index
      %330 = vector.load %arg10[%c0_198, %c0_199] : memref<8x128xf32, #tpu.memory_space<vmem>>, vector<8x128xf32>
      tpu.vector_store %arg10[%c0_198, %c0_199], %329 {strides = array<i32>} : memref<8x128xf32, #tpu.memory_space<vmem>>, vector<8x128xf32>,
      %cst_200 = arith.constant 0.000000e+00 : f32
      %331 = vector.broadcast %cst_200 : f32 to vector<8x128xf32>
      %c0_201 = arith.constant 0 : index
      %c0_202 = arith.constant 0 : index
      %332 = vector.load %arg11[%c0_201, %c0_202] : memref<8x128xf32, #tpu.memory_space<vmem>>, vector<8x128xf32>
      tpu.vector_store %arg11[%c0_201, %c0_202], %331 {strides = array<i32>} : memref<8x128xf32, #tpu.memory_space<vmem>>, vector<8x128xf32>,
    } else {
    }
    %c0 = arith.constant 0 : index
    %c0_1 = arith.constant 0 : index
    %c0_2 = arith.constant 0 : index
    %3 = vector.load %arg2[%c0, %c0_1, %c0_2] : memref<8x8x16xf32, #tpu.memory_space<vmem>>, vector<8x8x16xf32>
    %4 = vector.shape_cast %3 : vector<8x8x16xf32> to vector<64x16xf32>
    %c0_3 = arith.constant 0 : index
    %c0_4 = arith.constant 0 : index
    %5 = vector.load %arg3[%c0_3, %c0_4] : memref<16x128xf32, #tpu.memory_space<vmem>>, vector<16x128xf32>
    %cst = arith.constant dense<0.000000e+00> : vector<64x128xf32>
    %6 = tpu.matmul %4, %5, %cst {dimension_numbers = #tpu.dot_dimension_numbers<[1], [0], [0], [1], [0, 0, 1, 1], [], []>} : vector<64x16xf32>, vector<16x128xf32>, vector<64x128xf32> -> vector<64x128xf32>
    %c0_5 = arith.constant 0 : index
    %c0_6 = arith.constant 0 : index
    %7 = vector.load %arg4[%c0_5, %c0_6] : memref<1x128xf32, #tpu.memory_space<vmem>>, vector<1x128xf32>
    %8 = vector.broadcast %7 : vector<1x128xf32> to vector<64x128xf32>
    %9 = arith.addf %6, %8 : vector<64x128xf32>
    %10 = vector.shape_cast %9 : vector<64x128xf32> to vector<8x8x128xf32>
    %c0_7 = arith.constant 0 : index
    %c0_8 = arith.constant 0 : index
    %c0_9 = arith.constant 0 : index
    %11 = vector.load %arg12[%c0_7, %c0_8, %c0_9] : memref<8x8x128xf32, #tpu.memory_space<vmem>>, vector<8x8x128xf32>
    tpu.vector_store %arg12[%c0_7, %c0_8, %c0_9], %10 {strides = array<i32>} : memref<8x8x128xf32, #tpu.memory_space<vmem>>, vector<8x8x128xf32>,
    %c0_10 = arith.constant 0 : index
    %c0_11 = arith.constant 0 : index
    %12 = vector.load %arg8[%c0_10, %c0_11] : memref<8x128xf32, #tpu.memory_space<vmem>>, vector<8x128xf32>
    %c0_12 = arith.constant 0 : index
    %c0_13 = arith.constant 0 : index
    %13 = vector.load %arg9[%c0_12, %c0_13] : memref<8x128xf32, #tpu.memory_space<vmem>>, vector<8x128xf32>
    %c0_i32_14 = arith.constant 0 : i32
    %cst_15 = arith.constant 0.36787945 : f32
    %14 = vector.broadcast %cst_15 : f32 to vector<8x128xf32>
    %15 = arith.mulf %14, %12 : vector<8x128xf32>
    %16 = arith.index_cast %c0_i32_14 : i32 to index
    %c0_16 = arith.constant 0 : index
    %c0_17 = arith.constant 0 : index
    %17 = vector.load %arg12[%16, %c0_16, %c0_17] : memref<8x8x128xf32, #tpu.memory_space<vmem>>, vector<1x8x128xf32>
    %18 = vector.shape_cast %17 : vector<1x8x128xf32> to vector<8x128xf32>
    %19 = arith.addf %15, %18 : vector<8x128xf32>
    %cst_18 = arith.constant 0.606530666 : f32
    %20 = vector.broadcast %cst_18 : f32 to vector<8x128xf32>
    %21 = arith.mulf %20, %13 : vector<8x128xf32>
    %22 = arith.addf %21, %19 : vector<8x128xf32>
    %cst_19 = arith.constant 1.000000e+00 : f32
    %23 = vector.broadcast %cst_19 : f32 to vector<8x128xf32>
    %24 = arith.cmpf ogt, %22, %23 : vector<8x128xf32>
    %cst_20 = arith.constant 1.000000e+00 : f32
    %cst_21 = arith.constant 0.000000e+00 : f32
    %25 = vector.broadcast %cst_20 : f32 to vector<8x128xf32>
    %26 = vector.broadcast %cst_21 : f32 to vector<8x128xf32>
    %27 = arith.select %24, %25, %26 : vector<8x128xi1>, vector<8x128xf32>
    %28 = arith.index_cast %c0_i32_14 : i32 to index
    %c0_22 = arith.constant 0 : index
    %c0_23 = arith.constant 0 : index
    %29 = vector.load %arg12[%28, %c0_22, %c0_23] : memref<8x8x128xf32, #tpu.memory_space<vmem>>, vector<1x8x128xf32>
    %30 = vector.shape_cast %29 : vector<1x8x128xf32> to vector<8x128xf32>
    %31 = vector.shape_cast %27 : vector<8x128xf32> to vector<1x8x128xf32>
    tpu.vector_store %arg12[%28, %c0_22, %c0_23], %31 {strides = array<i32>} : memref<8x8x128xf32, #tpu.memory_space<vmem>>, vector<1x8x128xf32>,
    %cst_24 = arith.constant 0.000000e+00 : f32
    %32 = vector.broadcast %cst_24 : f32 to vector<8x128xf32>
    %33 = arith.select %24, %32, %22 : vector<8x128xi1>, vector<8x128xf32>
    %c1_i32 = arith.constant 1 : i32
    %cst_25 = arith.constant 0.36787945 : f32
    %34 = vector.broadcast %cst_25 : f32 to vector<8x128xf32>
    %35 = arith.mulf %34, %19 : vector<8x128xf32>
    %36 = arith.index_cast %c1_i32 : i32 to index
    %c0_26 = arith.constant 0 : index
    %c0_27 = arith.constant 0 : index
    %37 = vector.load %arg12[%36, %c0_26, %c0_27] : memref<8x8x128xf32, #tpu.memory_space<vmem>>, vector<1x8x128xf32>
    %38 = vector.shape_cast %37 : vector<1x8x128xf32> to vector<8x128xf32>
    %39 = arith.addf %35, %38 : vector<8x128xf32>
    %cst_28 = arith.constant 0.606530666 : f32
    %40 = vector.broadcast %cst_28 : f32 to vector<8x128xf32>
    %41 = arith.mulf %40, %33 : vector<8x128xf32>
    %42 = arith.addf %41, %39 : vector<8x128xf32>
    %cst_29 = arith.constant 1.000000e+00 : f32
    %43 = vector.broadcast %cst_29 : f32 to vector<8x128xf32>
    %44 = arith.cmpf ogt, %42, %43 : vector<8x128xf32>
    %cst_30 = arith.constant 1.000000e+00 : f32
    %cst_31 = arith.constant 0.000000e+00 : f32
    %45 = vector.broadcast %cst_30 : f32 to vector<8x128xf32>
    %46 = vector.broadcast %cst_31 : f32 to vector<8x128xf32>
    %47 = arith.select %44, %45, %46 : vector<8x128xi1>, vector<8x128xf32>
    %48 = arith.index_cast %c1_i32 : i32 to index
    %c0_32 = arith.constant 0 : index
    %c0_33 = arith.constant 0 : index
    %49 = vector.load %arg12[%48, %c0_32, %c0_33] : memref<8x8x128xf32, #tpu.memory_space<vmem>>, vector<1x8x128xf32>
    %50 = vector.shape_cast %49 : vector<1x8x128xf32> to vector<8x128xf32>
    %51 = vector.shape_cast %47 : vector<8x128xf32> to vector<1x8x128xf32>
    tpu.vector_store %arg12[%48, %c0_32, %c0_33], %51 {strides = array<i32>} : memref<8x8x128xf32, #tpu.memory_space<vmem>>, vector<1x8x128xf32>,
    %cst_34 = arith.constant 0.000000e+00 : f32
    %52 = vector.broadcast %cst_34 : f32 to vector<8x128xf32>
    %53 = arith.select %44, %52, %42 : vector<8x128xi1>, vector<8x128xf32>
    %c2_i32 = arith.constant 2 : i32
    %cst_35 = arith.constant 0.36787945 : f32
    %54 = vector.broadcast %cst_35 : f32 to vector<8x128xf32>
    %55 = arith.mulf %54, %39 : vector<8x128xf32>
    %56 = arith.index_cast %c2_i32 : i32 to index
    %c0_36 = arith.constant 0 : index
    %c0_37 = arith.constant 0 : index
    %57 = vector.load %arg12[%56, %c0_36, %c0_37] : memref<8x8x128xf32, #tpu.memory_space<vmem>>, vector<1x8x128xf32>
    %58 = vector.shape_cast %57 : vector<1x8x128xf32> to vector<8x128xf32>
    %59 = arith.addf %55, %58 : vector<8x128xf32>
    %cst_38 = arith.constant 0.606530666 : f32
    %60 = vector.broadcast %cst_38 : f32 to vector<8x128xf32>
    %61 = arith.mulf %60, %53 : vector<8x128xf32>
    %62 = arith.addf %61, %59 : vector<8x128xf32>
    %cst_39 = arith.constant 1.000000e+00 : f32
    %63 = vector.broadcast %cst_39 : f32 to vector<8x128xf32>
    %64 = arith.cmpf ogt, %62, %63 : vector<8x128xf32>
    %cst_40 = arith.constant 1.000000e+00 : f32
    %cst_41 = arith.constant 0.000000e+00 : f32
    %65 = vector.broadcast %cst_40 : f32 to vector<8x128xf32>
    %66 = vector.broadcast %cst_41 : f32 to vector<8x128xf32>
    %67 = arith.select %64, %65, %66 : vector<8x128xi1>, vector<8x128xf32>
    %68 = arith.index_cast %c2_i32 : i32 to index
    %c0_42 = arith.constant 0 : index
    %c0_43 = arith.constant 0 : index
    %69 = vector.load %arg12[%68, %c0_42, %c0_43] : memref<8x8x128xf32, #tpu.memory_space<vmem>>, vector<1x8x128xf32>
    %70 = vector.shape_cast %69 : vector<1x8x128xf32> to vector<8x128xf32>
    %71 = vector.shape_cast %67 : vector<8x128xf32> to vector<1x8x128xf32>
    tpu.vector_store %arg12[%68, %c0_42, %c0_43], %71 {strides = array<i32>} : memref<8x8x128xf32, #tpu.memory_space<vmem>>, vector<1x8x128xf32>,
    %cst_44 = arith.constant 0.000000e+00 : f32
    %72 = vector.broadcast %cst_44 : f32 to vector<8x128xf32>
    %73 = arith.select %64, %72, %62 : vector<8x128xi1>, vector<8x128xf32>
    %c3_i32 = arith.constant 3 : i32
    %cst_45 = arith.constant 0.36787945 : f32
    %74 = vector.broadcast %cst_45 : f32 to vector<8x128xf32>
    %75 = arith.mulf %74, %59 : vector<8x128xf32>
    %76 = arith.index_cast %c3_i32 : i32 to index
    %c0_46 = arith.constant 0 : index
    %c0_47 = arith.constant 0 : index
    %77 = vector.load %arg12[%76, %c0_46, %c0_47] : memref<8x8x128xf32, #tpu.memory_space<vmem>>, vector<1x8x128xf32>
    %78 = vector.shape_cast %77 : vector<1x8x128xf32> to vector<8x128xf32>
    %79 = arith.addf %75, %78 : vector<8x128xf32>
    %cst_48 = arith.constant 0.606530666 : f32
    %80 = vector.broadcast %cst_48 : f32 to vector<8x128xf32>
    %81 = arith.mulf %80, %73 : vector<8x128xf32>
    %82 = arith.addf %81, %79 : vector<8x128xf32>
    %cst_49 = arith.constant 1.000000e+00 : f32
    %83 = vector.broadcast %cst_49 : f32 to vector<8x128xf32>
    %84 = arith.cmpf ogt, %82, %83 : vector<8x128xf32>
    %cst_50 = arith.constant 1.000000e+00 : f32
    %cst_51 = arith.constant 0.000000e+00 : f32
    %85 = vector.broadcast %cst_50 : f32 to vector<8x128xf32>
    %86 = vector.broadcast %cst_51 : f32 to vector<8x128xf32>
    %87 = arith.select %84, %85, %86 : vector<8x128xi1>, vector<8x128xf32>
    %88 = arith.index_cast %c3_i32 : i32 to index
    %c0_52 = arith.constant 0 : index
    %c0_53 = arith.constant 0 : index
    %89 = vector.load %arg12[%88, %c0_52, %c0_53] : memref<8x8x128xf32, #tpu.memory_space<vmem>>, vector<1x8x128xf32>
    %90 = vector.shape_cast %89 : vector<1x8x128xf32> to vector<8x128xf32>
    %91 = vector.shape_cast %87 : vector<8x128xf32> to vector<1x8x128xf32>
    tpu.vector_store %arg12[%88, %c0_52, %c0_53], %91 {strides = array<i32>} : memref<8x8x128xf32, #tpu.memory_space<vmem>>, vector<1x8x128xf32>,
    %cst_54 = arith.constant 0.000000e+00 : f32
    %92 = vector.broadcast %cst_54 : f32 to vector<8x128xf32>
    %93 = arith.select %84, %92, %82 : vector<8x128xi1>, vector<8x128xf32>
    %c4_i32 = arith.constant 4 : i32
    %cst_55 = arith.constant 0.36787945 : f32
    %94 = vector.broadcast %cst_55 : f32 to vector<8x128xf32>
    %95 = arith.mulf %94, %79 : vector<8x128xf32>
    %96 = arith.index_cast %c4_i32 : i32 to index
    %c0_56 = arith.constant 0 : index
    %c0_57 = arith.constant 0 : index
    %97 = vector.load %arg12[%96, %c0_56, %c0_57] : memref<8x8x128xf32, #tpu.memory_space<vmem>>, vector<1x8x128xf32>
    %98 = vector.shape_cast %97 : vector<1x8x128xf32> to vector<8x128xf32>
    %99 = arith.addf %95, %98 : vector<8x128xf32>
    %cst_58 = arith.constant 0.606530666 : f32
    %100 = vector.broadcast %cst_58 : f32 to vector<8x128xf32>
    %101 = arith.mulf %100, %93 : vector<8x128xf32>
    %102 = arith.addf %101, %99 : vector<8x128xf32>
    %cst_59 = arith.constant 1.000000e+00 : f32
    %103 = vector.broadcast %cst_59 : f32 to vector<8x128xf32>
    %104 = arith.cmpf ogt, %102, %103 : vector<8x128xf32>
    %cst_60 = arith.constant 1.000000e+00 : f32
    %cst_61 = arith.constant 0.000000e+00 : f32
    %105 = vector.broadcast %cst_60 : f32 to vector<8x128xf32>
    %106 = vector.broadcast %cst_61 : f32 to vector<8x128xf32>
    %107 = arith.select %104, %105, %106 : vector<8x128xi1>, vector<8x128xf32>
    %108 = arith.index_cast %c4_i32 : i32 to index
    %c0_62 = arith.constant 0 : index
    %c0_63 = arith.constant 0 : index
    %109 = vector.load %arg12[%108, %c0_62, %c0_63] : memref<8x8x128xf32, #tpu.memory_space<vmem>>, vector<1x8x128xf32>
    %110 = vector.shape_cast %109 : vector<1x8x128xf32> to vector<8x128xf32>
    %111 = vector.shape_cast %107 : vector<8x128xf32> to vector<1x8x128xf32>
    tpu.vector_store %arg12[%108, %c0_62, %c0_63], %111 {strides = array<i32>} : memref<8x8x128xf32, #tpu.memory_space<vmem>>, vector<1x8x128xf32>,
    %cst_64 = arith.constant 0.000000e+00 : f32
    %112 = vector.broadcast %cst_64 : f32 to vector<8x128xf32>
    %113 = arith.select %104, %112, %102 : vector<8x128xi1>, vector<8x128xf32>
    %c5_i32 = arith.constant 5 : i32
    %cst_65 = arith.constant 0.36787945 : f32
    %114 = vector.broadcast %cst_65 : f32 to vector<8x128xf32>
    %115 = arith.mulf %114, %99 : vector<8x128xf32>
    %116 = arith.index_cast %c5_i32 : i32 to index
    %c0_66 = arith.constant 0 : index
    %c0_67 = arith.constant 0 : index
    %117 = vector.load %arg12[%116, %c0_66, %c0_67] : memref<8x8x128xf32, #tpu.memory_space<vmem>>, vector<1x8x128xf32>
    %118 = vector.shape_cast %117 : vector<1x8x128xf32> to vector<8x128xf32>
    %119 = arith.addf %115, %118 : vector<8x128xf32>
    %cst_68 = arith.constant 0.606530666 : f32
    %120 = vector.broadcast %cst_68 : f32 to vector<8x128xf32>
    %121 = arith.mulf %120, %113 : vector<8x128xf32>
    %122 = arith.addf %121, %119 : vector<8x128xf32>
    %cst_69 = arith.constant 1.000000e+00 : f32
    %123 = vector.broadcast %cst_69 : f32 to vector<8x128xf32>
    %124 = arith.cmpf ogt, %122, %123 : vector<8x128xf32>
    %cst_70 = arith.constant 1.000000e+00 : f32
    %cst_71 = arith.constant 0.000000e+00 : f32
    %125 = vector.broadcast %cst_70 : f32 to vector<8x128xf32>
    %126 = vector.broadcast %cst_71 : f32 to vector<8x128xf32>
    %127 = arith.select %124, %125, %126 : vector<8x128xi1>, vector<8x128xf32>
    %128 = arith.index_cast %c5_i32 : i32 to index
    %c0_72 = arith.constant 0 : index
    %c0_73 = arith.constant 0 : index
    %129 = vector.load %arg12[%128, %c0_72, %c0_73] : memref<8x8x128xf32, #tpu.memory_space<vmem>>, vector<1x8x128xf32>
    %130 = vector.shape_cast %129 : vector<1x8x128xf32> to vector<8x128xf32>
    %131 = vector.shape_cast %127 : vector<8x128xf32> to vector<1x8x128xf32>
    tpu.vector_store %arg12[%128, %c0_72, %c0_73], %131 {strides = array<i32>} : memref<8x8x128xf32, #tpu.memory_space<vmem>>, vector<1x8x128xf32>,
    %cst_74 = arith.constant 0.000000e+00 : f32
    %132 = vector.broadcast %cst_74 : f32 to vector<8x128xf32>
    %133 = arith.select %124, %132, %122 : vector<8x128xi1>, vector<8x128xf32>
    %c6_i32 = arith.constant 6 : i32
    %cst_75 = arith.constant 0.36787945 : f32
    %134 = vector.broadcast %cst_75 : f32 to vector<8x128xf32>
    %135 = arith.mulf %134, %119 : vector<8x128xf32>
    %136 = arith.index_cast %c6_i32 : i32 to index
    %c0_76 = arith.constant 0 : index
    %c0_77 = arith.constant 0 : index
    %137 = vector.load %arg12[%136, %c0_76, %c0_77] : memref<8x8x128xf32, #tpu.memory_space<vmem>>, vector<1x8x128xf32>
    %138 = vector.shape_cast %137 : vector<1x8x128xf32> to vector<8x128xf32>
    %139 = arith.addf %135, %138 : vector<8x128xf32>
    %cst_78 = arith.constant 0.606530666 : f32
    %140 = vector.broadcast %cst_78 : f32 to vector<8x128xf32>
    %141 = arith.mulf %140, %133 : vector<8x128xf32>
    %142 = arith.addf %141, %139 : vector<8x128xf32>
    %cst_79 = arith.constant 1.000000e+00 : f32
    %143 = vector.broadcast %cst_79 : f32 to vector<8x128xf32>
    %144 = arith.cmpf ogt, %142, %143 : vector<8x128xf32>
    %cst_80 = arith.constant 1.000000e+00 : f32
    %cst_81 = arith.constant 0.000000e+00 : f32
    %145 = vector.broadcast %cst_80 : f32 to vector<8x128xf32>
    %146 = vector.broadcast %cst_81 : f32 to vector<8x128xf32>
    %147 = arith.select %144, %145, %146 : vector<8x128xi1>, vector<8x128xf32>
    %148 = arith.index_cast %c6_i32 : i32 to index
    %c0_82 = arith.constant 0 : index
    %c0_83 = arith.constant 0 : index
    %149 = vector.load %arg12[%148, %c0_82, %c0_83] : memref<8x8x128xf32, #tpu.memory_space<vmem>>, vector<1x8x128xf32>
    %150 = vector.shape_cast %149 : vector<1x8x128xf32> to vector<8x128xf32>
    %151 = vector.shape_cast %147 : vector<8x128xf32> to vector<1x8x128xf32>
    tpu.vector_store %arg12[%148, %c0_82, %c0_83], %151 {strides = array<i32>} : memref<8x8x128xf32, #tpu.memory_space<vmem>>, vector<1x8x128xf32>,
    %cst_84 = arith.constant 0.000000e+00 : f32
    %152 = vector.broadcast %cst_84 : f32 to vector<8x128xf32>
    %153 = arith.select %144, %152, %142 : vector<8x128xi1>, vector<8x128xf32>
    %c7_i32 = arith.constant 7 : i32
    %cst_85 = arith.constant 0.36787945 : f32
    %154 = vector.broadcast %cst_85 : f32 to vector<8x128xf32>
    %155 = arith.mulf %154, %139 : vector<8x128xf32>
    %156 = arith.index_cast %c7_i32 : i32 to index
    %c0_86 = arith.constant 0 : index
    %c0_87 = arith.constant 0 : index
    %157 = vector.load %arg12[%156, %c0_86, %c0_87] : memref<8x8x128xf32, #tpu.memory_space<vmem>>, vector<1x8x128xf32>
    %158 = vector.shape_cast %157 : vector<1x8x128xf32> to vector<8x128xf32>
    %159 = arith.addf %155, %158 : vector<8x128xf32>
    %cst_88 = arith.constant 0.606530666 : f32
    %160 = vector.broadcast %cst_88 : f32 to vector<8x128xf32>
    %161 = arith.mulf %160, %153 : vector<8x128xf32>
    %162 = arith.addf %161, %159 : vector<8x128xf32>
    %cst_89 = arith.constant 1.000000e+00 : f32
    %163 = vector.broadcast %cst_89 : f32 to vector<8x128xf32>
    %164 = arith.cmpf ogt, %162, %163 : vector<8x128xf32>
    %cst_90 = arith.constant 1.000000e+00 : f32
    %cst_91 = arith.constant 0.000000e+00 : f32
    %165 = vector.broadcast %cst_90 : f32 to vector<8x128xf32>
    %166 = vector.broadcast %cst_91 : f32 to vector<8x128xf32>
    %167 = arith.select %164, %165, %166 : vector<8x128xi1>, vector<8x128xf32>
    %168 = arith.index_cast %c7_i32 : i32 to index
    %c0_92 = arith.constant 0 : index
    %c0_93 = arith.constant 0 : index
    %169 = vector.load %arg12[%168, %c0_92, %c0_93] : memref<8x8x128xf32, #tpu.memory_space<vmem>>, vector<1x8x128xf32>
    %170 = vector.shape_cast %169 : vector<1x8x128xf32> to vector<8x128xf32>
    %171 = vector.shape_cast %167 : vector<8x128xf32> to vector<1x8x128xf32>
    tpu.vector_store %arg12[%168, %c0_92, %c0_93], %171 {strides = array<i32>} : memref<8x8x128xf32, #tpu.memory_space<vmem>>, vector<1x8x128xf32>,
    %cst_94 = arith.constant 0.000000e+00 : f32
    %172 = vector.broadcast %cst_94 : f32 to vector<8x128xf32>
    %173 = arith.select %164, %172, %162 : vector<8x128xi1>, vector<8x128xf32>
    %c8_i32 = arith.constant 8 : i32
    %c0_95 = arith.constant 0 : index
    %c0_96 = arith.constant 0 : index
    %174 = vector.load %arg8[%c0_95, %c0_96] : memref<8x128xf32, #tpu.memory_space<vmem>>, vector<8x128xf32>
    tpu.vector_store %arg8[%c0_95, %c0_96], %159 {strides = array<i32>} : memref<8x128xf32, #tpu.memory_space<vmem>>, vector<8x128xf32>,
    %c0_97 = arith.constant 0 : index
    %c0_98 = arith.constant 0 : index
    %175 = vector.load %arg9[%c0_97, %c0_98] : memref<8x128xf32, #tpu.memory_space<vmem>>, vector<8x128xf32>
    tpu.vector_store %arg9[%c0_97, %c0_98], %173 {strides = array<i32>} : memref<8x128xf32, #tpu.memory_space<vmem>>, vector<8x128xf32>,
    %c0_99 = arith.constant 0 : index
    %c0_100 = arith.constant 0 : index
    %c0_101 = arith.constant 0 : index
    %176 = vector.load %arg12[%c0_99, %c0_100, %c0_101] : memref<8x8x128xf32, #tpu.memory_space<vmem>>, vector<8x8x128xf32>
    %177 = vector.shape_cast %176 : vector<8x8x128xf32> to vector<64x128xf32>
    %c0_102 = arith.constant 0 : index
    %c0_103 = arith.constant 0 : index
    %178 = vector.load %arg5[%c0_102, %c0_103] : memref<128x128xf32, #tpu.memory_space<vmem>>, vector<128x128xf32>
    %cst_104 = arith.constant dense<0.000000e+00> : vector<64x128xf32>
    %179 = tpu.matmul %177, %178, %cst_104 {dimension_numbers = #tpu.dot_dimension_numbers<[1], [0], [0], [1], [0, 0, 1, 1], [], []>} : vector<64x128xf32>, vector<128x128xf32>, vector<64x128xf32> -> vector<64x128xf32>
    %c0_105 = arith.constant 0 : index
    %c0_106 = arith.constant 0 : index
    %180 = vector.load %arg6[%c0_105, %c0_106] : memref<1x128xf32, #tpu.memory_space<vmem>>, vector<1x128xf32>
    %181 = vector.broadcast %180 : vector<1x128xf32> to vector<64x128xf32>
    %182 = arith.addf %179, %181 : vector<64x128xf32>
    %183 = vector.shape_cast %182 : vector<64x128xf32> to vector<8x8x128xf32>
    %c0_107 = arith.constant 0 : index
    %c0_108 = arith.constant 0 : index
    %c0_109 = arith.constant 0 : index
    %184 = vector.load %arg7[%c0_107, %c0_108, %c0_109] : memref<8x8x128xf32, #tpu.memory_space<vmem>>, vector<8x8x128xf32>
    tpu.vector_store %arg7[%c0_107, %c0_108, %c0_109], %183 {strides = array<i32>} : memref<8x8x128xf32, #tpu.memory_space<vmem>>, vector<8x8x128xf32>,
    %c0_110 = arith.constant 0 : index
    %c0_111 = arith.constant 0 : index
    %185 = vector.load %arg10[%c0_110, %c0_111] : memref<8x128xf32, #tpu.memory_space<vmem>>, vector<8x128xf32>
    %c0_112 = arith.constant 0 : index
    %c0_113 = arith.constant 0 : index
    %186 = vector.load %arg11[%c0_112, %c0_113] : memref<8x128xf32, #tpu.memory_space<vmem>>, vector<8x128xf32>
    %c0_i32_114 = arith.constant 0 : i32
    %cst_115 = arith.constant 0.36787945 : f32
    %187 = vector.broadcast %cst_115 : f32 to vector<8x128xf32>
    %188 = arith.mulf %187, %185 : vector<8x128xf32>
    %189 = arith.index_cast %c0_i32_114 : i32 to index
    %c0_116 = arith.constant 0 : index
    %c0_117 = arith.constant 0 : index
    %190 = vector.load %arg7[%189, %c0_116, %c0_117] : memref<8x8x128xf32, #tpu.memory_space<vmem>>, vector<1x8x128xf32>
    %191 = vector.shape_cast %190 : vector<1x8x128xf32> to vector<8x128xf32>
    %192 = arith.addf %188, %191 : vector<8x128xf32>
    %cst_118 = arith.constant 0.904837429 : f32
    %193 = vector.broadcast %cst_118 : f32 to vector<8x128xf32>
    %194 = arith.mulf %193, %186 : vector<8x128xf32>
    %195 = arith.addf %194, %192 : vector<8x128xf32>
    %196 = arith.index_cast %c0_i32_114 : i32 to index
    %c0_119 = arith.constant 0 : index
    %c0_120 = arith.constant 0 : index
    %197 = vector.load %arg7[%196, %c0_119, %c0_120] : memref<8x8x128xf32, #tpu.memory_space<vmem>>, vector<1x8x128xf32>
    %198 = vector.shape_cast %197 : vector<1x8x128xf32> to vector<8x128xf32>
    %199 = vector.shape_cast %195 : vector<8x128xf32> to vector<1x8x128xf32>
    tpu.vector_store %arg7[%196, %c0_119, %c0_120], %199 {strides = array<i32>} : memref<8x8x128xf32, #tpu.memory_space<vmem>>, vector<1x8x128xf32>,
    %cst_121 = arith.constant 1.000000e+00 : f32
    %200 = vector.broadcast %cst_121 : f32 to vector<8x128xf32>
    %201 = arith.cmpf ogt, %195, %200 : vector<8x128xf32>
    %cst_122 = arith.constant 0.000000e+00 : f32
    %202 = vector.broadcast %cst_122 : f32 to vector<8x128xf32>
    %203 = arith.select %201, %202, %195 : vector<8x128xi1>, vector<8x128xf32>
    %c1_i32_123 = arith.constant 1 : i32
    %cst_124 = arith.constant 0.36787945 : f32
    %204 = vector.broadcast %cst_124 : f32 to vector<8x128xf32>
    %205 = arith.mulf %204, %192 : vector<8x128xf32>
    %206 = arith.index_cast %c1_i32_123 : i32 to index
    %c0_125 = arith.constant 0 : index
    %c0_126 = arith.constant 0 : index
    %207 = vector.load %arg7[%206, %c0_125, %c0_126] : memref<8x8x128xf32, #tpu.memory_space<vmem>>, vector<1x8x128xf32>
    %208 = vector.shape_cast %207 : vector<1x8x128xf32> to vector<8x128xf32>
    %209 = arith.addf %205, %208 : vector<8x128xf32>
    %cst_127 = arith.constant 0.904837429 : f32
    %210 = vector.broadcast %cst_127 : f32 to vector<8x128xf32>
    %211 = arith.mulf %210, %203 : vector<8x128xf32>
    %212 = arith.addf %211, %209 : vector<8x128xf32>
    %213 = arith.index_cast %c1_i32_123 : i32 to index
    %c0_128 = arith.constant 0 : index
    %c0_129 = arith.constant 0 : index
    %214 = vector.load %arg7[%213, %c0_128, %c0_129] : memref<8x8x128xf32, #tpu.memory_space<vmem>>, vector<1x8x128xf32>
    %215 = vector.shape_cast %214 : vector<1x8x128xf32> to vector<8x128xf32>
    %216 = vector.shape_cast %212 : vector<8x128xf32> to vector<1x8x128xf32>
    tpu.vector_store %arg7[%213, %c0_128, %c0_129], %216 {strides = array<i32>} : memref<8x8x128xf32, #tpu.memory_space<vmem>>, vector<1x8x128xf32>,
    %cst_130 = arith.constant 1.000000e+00 : f32
    %217 = vector.broadcast %cst_130 : f32 to vector<8x128xf32>
    %218 = arith.cmpf ogt, %212, %217 : vector<8x128xf32>
    %cst_131 = arith.constant 0.000000e+00 : f32
    %219 = vector.broadcast %cst_131 : f32 to vector<8x128xf32>
    %220 = arith.select %218, %219, %212 : vector<8x128xi1>, vector<8x128xf32>
    %c2_i32_132 = arith.constant 2 : i32
    %cst_133 = arith.constant 0.36787945 : f32
    %221 = vector.broadcast %cst_133 : f32 to vector<8x128xf32>
    %222 = arith.mulf %221, %209 : vector<8x128xf32>
    %223 = arith.index_cast %c2_i32_132 : i32 to index
    %c0_134 = arith.constant 0 : index
    %c0_135 = arith.constant 0 : index
    %224 = vector.load %arg7[%223, %c0_134, %c0_135] : memref<8x8x128xf32, #tpu.memory_space<vmem>>, vector<1x8x128xf32>
    %225 = vector.shape_cast %224 : vector<1x8x128xf32> to vector<8x128xf32>
    %226 = arith.addf %222, %225 : vector<8x128xf32>
    %cst_136 = arith.constant 0.904837429 : f32
    %227 = vector.broadcast %cst_136 : f32 to vector<8x128xf32>
    %228 = arith.mulf %227, %220 : vector<8x128xf32>
    %229 = arith.addf %228, %226 : vector<8x128xf32>
    %230 = arith.index_cast %c2_i32_132 : i32 to index
    %c0_137 = arith.constant 0 : index
    %c0_138 = arith.constant 0 : index
    %231 = vector.load %arg7[%230, %c0_137, %c0_138] : memref<8x8x128xf32, #tpu.memory_space<vmem>>, vector<1x8x128xf32>
    %232 = vector.shape_cast %231 : vector<1x8x128xf32> to vector<8x128xf32>
    %233 = vector.shape_cast %229 : vector<8x128xf32> to vector<1x8x128xf32>
    tpu.vector_store %arg7[%230, %c0_137, %c0_138], %233 {strides = array<i32>} : memref<8x8x128xf32, #tpu.memory_space<vmem>>, vector<1x8x128xf32>,
    %cst_139 = arith.constant 1.000000e+00 : f32
    %234 = vector.broadcast %cst_139 : f32 to vector<8x128xf32>
    %235 = arith.cmpf ogt, %229, %234 : vector<8x128xf32>
    %cst_140 = arith.constant 0.000000e+00 : f32
    %236 = vector.broadcast %cst_140 : f32 to vector<8x128xf32>
    %237 = arith.select %235, %236, %229 : vector<8x128xi1>, vector<8x128xf32>
    %c3_i32_141 = arith.constant 3 : i32
    %cst_142 = arith.constant 0.36787945 : f32
    %238 = vector.broadcast %cst_142 : f32 to vector<8x128xf32>
    %239 = arith.mulf %238, %226 : vector<8x128xf32>
    %240 = arith.index_cast %c3_i32_141 : i32 to index
    %c0_143 = arith.constant 0 : index
    %c0_144 = arith.constant 0 : index
    %241 = vector.load %arg7[%240, %c0_143, %c0_144] : memref<8x8x128xf32, #tpu.memory_space<vmem>>, vector<1x8x128xf32>
    %242 = vector.shape_cast %241 : vector<1x8x128xf32> to vector<8x128xf32>
    %243 = arith.addf %239, %242 : vector<8x128xf32>
    %cst_145 = arith.constant 0.904837429 : f32
    %244 = vector.broadcast %cst_145 : f32 to vector<8x128xf32>
    %245 = arith.mulf %244, %237 : vector<8x128xf32>
    %246 = arith.addf %245, %243 : vector<8x128xf32>
    %247 = arith.index_cast %c3_i32_141 : i32 to index
    %c0_146 = arith.constant 0 : index
    %c0_147 = arith.constant 0 : index
    %248 = vector.load %arg7[%247, %c0_146, %c0_147] : memref<8x8x128xf32, #tpu.memory_space<vmem>>, vector<1x8x128xf32>
    %249 = vector.shape_cast %248 : vector<1x8x128xf32> to vector<8x128xf32>
    %250 = vector.shape_cast %246 : vector<8x128xf32> to vector<1x8x128xf32>
    tpu.vector_store %arg7[%247, %c0_146, %c0_147], %250 {strides = array<i32>} : memref<8x8x128xf32, #tpu.memory_space<vmem>>, vector<1x8x128xf32>,
    %cst_148 = arith.constant 1.000000e+00 : f32
    %251 = vector.broadcast %cst_148 : f32 to vector<8x128xf32>
    %252 = arith.cmpf ogt, %246, %251 : vector<8x128xf32>
    %cst_149 = arith.constant 0.000000e+00 : f32
    %253 = vector.broadcast %cst_149 : f32 to vector<8x128xf32>
    %254 = arith.select %252, %253, %246 : vector<8x128xi1>, vector<8x128xf32>
    %c4_i32_150 = arith.constant 4 : i32
    %cst_151 = arith.constant 0.36787945 : f32
    %255 = vector.broadcast %cst_151 : f32 to vector<8x128xf32>
    %256 = arith.mulf %255, %243 : vector<8x128xf32>
    %257 = arith.index_cast %c4_i32_150 : i32 to index
    %c0_152 = arith.constant 0 : index
    %c0_153 = arith.constant 0 : index
    %258 = vector.load %arg7[%257, %c0_152, %c0_153] : memref<8x8x128xf32, #tpu.memory_space<vmem>>, vector<1x8x128xf32>
    %259 = vector.shape_cast %258 : vector<1x8x128xf32> to vector<8x128xf32>
    %260 = arith.addf %256, %259 : vector<8x128xf32>
    %cst_154 = arith.constant 0.904837429 : f32
    %261 = vector.broadcast %cst_154 : f32 to vector<8x128xf32>
    %262 = arith.mulf %261, %254 : vector<8x128xf32>
    %263 = arith.addf %262, %260 : vector<8x128xf32>
    %264 = arith.index_cast %c4_i32_150 : i32 to index
    %c0_155 = arith.constant 0 : index
    %c0_156 = arith.constant 0 : index
    %265 = vector.load %arg7[%264, %c0_155, %c0_156] : memref<8x8x128xf32, #tpu.memory_space<vmem>>, vector<1x8x128xf32>
    %266 = vector.shape_cast %265 : vector<1x8x128xf32> to vector<8x128xf32>
    %267 = vector.shape_cast %263 : vector<8x128xf32> to vector<1x8x128xf32>
    tpu.vector_store %arg7[%264, %c0_155, %c0_156], %267 {strides = array<i32>} : memref<8x8x128xf32, #tpu.memory_space<vmem>>, vector<1x8x128xf32>,
    %cst_157 = arith.constant 1.000000e+00 : f32
    %268 = vector.broadcast %cst_157 : f32 to vector<8x128xf32>
    %269 = arith.cmpf ogt, %263, %268 : vector<8x128xf32>
    %cst_158 = arith.constant 0.000000e+00 : f32
    %270 = vector.broadcast %cst_158 : f32 to vector<8x128xf32>
    %271 = arith.select %269, %270, %263 : vector<8x128xi1>, vector<8x128xf32>
    %c5_i32_159 = arith.constant 5 : i32
    %cst_160 = arith.constant 0.36787945 : f32
    %272 = vector.broadcast %cst_160 : f32 to vector<8x128xf32>
    %273 = arith.mulf %272, %260 : vector<8x128xf32>
    %274 = arith.index_cast %c5_i32_159 : i32 to index
    %c0_161 = arith.constant 0 : index
    %c0_162 = arith.constant 0 : index
    %275 = vector.load %arg7[%274, %c0_161, %c0_162] : memref<8x8x128xf32, #tpu.memory_space<vmem>>, vector<1x8x128xf32>
    %276 = vector.shape_cast %275 : vector<1x8x128xf32> to vector<8x128xf32>
    %277 = arith.addf %273, %276 : vector<8x128xf32>
    %cst_163 = arith.constant 0.904837429 : f32
    %278 = vector.broadcast %cst_163 : f32 to vector<8x128xf32>
    %279 = arith.mulf %278, %271 : vector<8x128xf32>
    %280 = arith.addf %279, %277 : vector<8x128xf32>
    %281 = arith.index_cast %c5_i32_159 : i32 to index
    %c0_164 = arith.constant 0 : index
    %c0_165 = arith.constant 0 : index
    %282 = vector.load %arg7[%281, %c0_164, %c0_165] : memref<8x8x128xf32, #tpu.memory_space<vmem>>, vector<1x8x128xf32>
    %283 = vector.shape_cast %282 : vector<1x8x128xf32> to vector<8x128xf32>
    %284 = vector.shape_cast %280 : vector<8x128xf32> to vector<1x8x128xf32>
    tpu.vector_store %arg7[%281, %c0_164, %c0_165], %284 {strides = array<i32>} : memref<8x8x128xf32, #tpu.memory_space<vmem>>, vector<1x8x128xf32>,
    %cst_166 = arith.constant 1.000000e+00 : f32
    %285 = vector.broadcast %cst_166 : f32 to vector<8x128xf32>
    %286 = arith.cmpf ogt, %280, %285 : vector<8x128xf32>
    %cst_167 = arith.constant 0.000000e+00 : f32
    %287 = vector.broadcast %cst_167 : f32 to vector<8x128xf32>
    %288 = arith.select %286, %287, %280 : vector<8x128xi1>, vector<8x128xf32>
    %c6_i32_168 = arith.constant 6 : i32
    %cst_169 = arith.constant 0.36787945 : f32
    %289 = vector.broadcast %cst_169 : f32 to vector<8x128xf32>
    %290 = arith.mulf %289, %277 : vector<8x128xf32>
    %291 = arith.index_cast %c6_i32_168 : i32 to index
    %c0_170 = arith.constant 0 : index
    %c0_171 = arith.constant 0 : index
    %292 = vector.load %arg7[%291, %c0_170, %c0_171] : memref<8x8x128xf32, #tpu.memory_space<vmem>>, vector<1x8x128xf32>
    %293 = vector.shape_cast %292 : vector<1x8x128xf32> to vector<8x128xf32>
    %294 = arith.addf %290, %293 : vector<8x128xf32>
    %cst_172 = arith.constant 0.904837429 : f32
    %295 = vector.broadcast %cst_172 : f32 to vector<8x128xf32>
    %296 = arith.mulf %295, %288 : vector<8x128xf32>
    %297 = arith.addf %296, %294 : vector<8x128xf32>
    %298 = arith.index_cast %c6_i32_168 : i32 to index
    %c0_173 = arith.constant 0 : index
    %c0_174 = arith.constant 0 : index
    %299 = vector.load %arg7[%298, %c0_173, %c0_174] : memref<8x8x128xf32, #tpu.memory_space<vmem>>, vector<1x8x128xf32>
    %300 = vector.shape_cast %299 : vector<1x8x128xf32> to vector<8x128xf32>
    %301 = vector.shape_cast %297 : vector<8x128xf32> to vector<1x8x128xf32>
    tpu.vector_store %arg7[%298, %c0_173, %c0_174], %301 {strides = array<i32>} : memref<8x8x128xf32, #tpu.memory_space<vmem>>, vector<1x8x128xf32>,
    %cst_175 = arith.constant 1.000000e+00 : f32
    %302 = vector.broadcast %cst_175 : f32 to vector<8x128xf32>
    %303 = arith.cmpf ogt, %297, %302 : vector<8x128xf32>
    %cst_176 = arith.constant 0.000000e+00 : f32
    %304 = vector.broadcast %cst_176 : f32 to vector<8x128xf32>
    %305 = arith.select %303, %304, %297 : vector<8x128xi1>, vector<8x128xf32>
    %c7_i32_177 = arith.constant 7 : i32
    %cst_178 = arith.constant 0.36787945 : f32
    %306 = vector.broadcast %cst_178 : f32 to vector<8x128xf32>
    %307 = arith.mulf %306, %294 : vector<8x128xf32>
    %308 = arith.index_cast %c7_i32_177 : i32 to index
    %c0_179 = arith.constant 0 : index
    %c0_180 = arith.constant 0 : index
    %309 = vector.load %arg7[%308, %c0_179, %c0_180] : memref<8x8x128xf32, #tpu.memory_space<vmem>>, vector<1x8x128xf32>
    %310 = vector.shape_cast %309 : vector<1x8x128xf32> to vector<8x128xf32>
    %311 = arith.addf %307, %310 : vector<8x128xf32>
    %cst_181 = arith.constant 0.904837429 : f32
    %312 = vector.broadcast %cst_181 : f32 to vector<8x128xf32>
    %313 = arith.mulf %312, %305 : vector<8x128xf32>
    %314 = arith.addf %313, %311 : vector<8x128xf32>
    %315 = arith.index_cast %c7_i32_177 : i32 to index
    %c0_182 = arith.constant 0 : index
    %c0_183 = arith.constant 0 : index
    %316 = vector.load %arg7[%315, %c0_182, %c0_183] : memref<8x8x128xf32, #tpu.memory_space<vmem>>, vector<1x8x128xf32>
    %317 = vector.shape_cast %316 : vector<1x8x128xf32> to vector<8x128xf32>
    %318 = vector.shape_cast %314 : vector<8x128xf32> to vector<1x8x128xf32>
    tpu.vector_store %arg7[%315, %c0_182, %c0_183], %318 {strides = array<i32>} : memref<8x8x128xf32, #tpu.memory_space<vmem>>, vector<1x8x128xf32>,
    %cst_184 = arith.constant 1.000000e+00 : f32
    %319 = vector.broadcast %cst_184 : f32 to vector<8x128xf32>
    %320 = arith.cmpf ogt, %314, %319 : vector<8x128xf32>
    %cst_185 = arith.constant 0.000000e+00 : f32
    %321 = vector.broadcast %cst_185 : f32 to vector<8x128xf32>
    %322 = arith.select %320, %321, %314 : vector<8x128xi1>, vector<8x128xf32>
    %c8_i32_186 = arith.constant 8 : i32
    %c0_187 = arith.constant 0 : index
    %c0_188 = arith.constant 0 : index
    %323 = vector.load %arg10[%c0_187, %c0_188] : memref<8x128xf32, #tpu.memory_space<vmem>>, vector<8x128xf32>
    tpu.vector_store %arg10[%c0_187, %c0_188], %311 {strides = array<i32>} : memref<8x128xf32, #tpu.memory_space<vmem>>, vector<8x128xf32>,
    %c0_189 = arith.constant 0 : index
    %c0_190 = arith.constant 0 : index
    %324 = vector.load %arg11[%c0_189, %c0_190] : memref<8x128xf32, #tpu.memory_space<vmem>>, vector<8x128xf32>
    tpu.vector_store %arg11[%c0_189, %c0_190], %322 {strides = array<i32>} : memref<8x128xf32, #tpu.memory_space<vmem>>, vector<8x128xf32>,
    return
  }
  func.func @transform_0(%arg0: i32, %arg1: i32) -> (i32, i32, i32) {
    %c0_i32 = arith.constant 0 : i32
    %c0_i32_0 = arith.constant 0 : i32
    return %arg1, %arg0, %c0_i32 : i32, i32, i32
  }
  func.func @transform_1(%arg0: i32, %arg1: i32) -> (i32, i32) {
    %c0_i32 = arith.constant 0 : i32
    %c0_i32_0 = arith.constant 0 : i32
    %c0_i32_1 = arith.constant 0 : i32
    return %c0_i32, %c0_i32_0 : i32, i32
  }
  func.func @transform_2(%arg0: i32, %arg1: i32) -> (i32, i32) {
    %c0_i32 = arith.constant 0 : i32
    %c0_i32_0 = arith.constant 0 : i32
    %c0_i32_1 = arith.constant 0 : i32
    return %c0_i32, %c0_i32_0 : i32, i32
  }
  func.func @transform_3(%arg0: i32, %arg1: i32) -> (i32, i32) {
    %c0_i32 = arith.constant 0 : i32
    %c0_i32_0 = arith.constant 0 : i32
    %c0_i32_1 = arith.constant 0 : i32
    return %c0_i32, %c0_i32_0 : i32, i32
  }
  func.func @transform_4(%arg0: i32, %arg1: i32) -> (i32, i32) {
    %c0_i32 = arith.constant 0 : i32
    %c0_i32_0 = arith.constant 0 : i32
    %c0_i32_1 = arith.constant 0 : i32
    return %c0_i32, %c0_i32_0 : i32, i32
  }
  func.func @transform_5(%arg0: i32, %arg1: i32) -> (i32, i32, i32) {
    %c0_i32 = arith.constant 0 : i32
    %c0_i32_0 = arith.constant 0 : i32
    return %arg1, %arg0, %c0_i32 : i32, i32, i32
  }
}

</mosaic_0001>

<llo_original>
// kernel: tpu_custom_call.1
$region0: #{tpu_custom_call.1}
  #allocation0 [shape = 'u32[]', space=smem, size = 0x4, offset = 0x4, fixed_abs, tag = 'smem constant byte address 0x4 - core index']
  #allocation1 [shape = 'u32[144,128]{1,0:T(1,128)}', space=vmem, size = 0x12000, scoped, tag = 'internal scratch']
  #allocation2 [shape = 'f32[8,128]{1,0:T(8,128)}', space=vmem, size = 0x1000, scoped, tag = 'scratch operand']
  #allocation3 [shape = 'f32[8,128]{1,0:T(8,128)}', space=vmem, size = 0x1000, scoped, tag = 'scratch operand']
  #allocation4 [shape = 'f32[8,128]{1,0:T(8,128)}', space=vmem, size = 0x1000, scoped, tag = 'scratch operand']
  #allocation5 [shape = 'f32[8,128]{1,0:T(8,128)}', space=vmem, size = 0x1000, scoped, tag = 'scratch operand']
  #allocation6 [shape = 'f32[8,8,128]{2,1,0:T(8,128)}', space=vmem, size = 0x8000, scoped, tag = 'scratch operand']
  %s0 = inlined_call_operand.hbm [shape: f32[8,8,16], index: 0, kind: input, shape index: {}]
  %s1 = inlined_call_operand.hbm [shape: f32[16,128], index: 1, kind: input, shape index: {}]
  %s2 = inlined_call_operand.vmem [shape: f32[1,128], index: 2, kind: input, shape index: {}]
  %s3 = inlined_call_operand.hbm [shape: f32[128,128], index: 3, kind: input, shape index: {}]
  %s4 = inlined_call_operand.vmem [shape: f32[1,128], index: 4, kind: input, shape index: {}]
  %s5 = inlined_call_operand.hbm [shape: f32[8,8,128], index: 5, kind: output, shape index: {}]
  %s6 = sld [smem:[#allocation0]]
  $region46: #{tpu_custom_call.1} parent=0
    _
  %s8 = ssub.s32 1, %s6
  %s9 = scalar_select 0, %s8, %s6
  $region1: #{tpu_custom_call.1} parent=0
    #allocation7 [shape = 'u8[32768]{0}', space=vmem, size = 0x8000, scoped, tag = 'input window, operand 0, single buffered']
    #allocation8 [shape = 's32[1]{0}', space=sflag, size = 0x4, scoped, tag = 'scoped memory for tpu_custom_call.1']
    #allocation9 [shape = 's32[1]{0}', space=sflag, size = 0x4, scoped, tag = 'scoped memory for tpu_custom_call.1']
    #allocation10 [shape = 'u8[8192]{0}', space=vmem, size = 0x2000, scoped, tag = 'input window, operand 1, single buffered']
    #allocation11 [shape = 's32[1]{0}', space=sflag, size = 0x4, scoped, tag = 'scoped memory for tpu_custom_call.1']
    #allocation12 [shape = 'u8[65536]{0}', space=vmem, size = 0x10000, scoped, tag = 'input window, operand 3, single buffered']
    #allocation13 [shape = 'u8[32768]{0}', space=vmem, size = 0x8000, scoped, tag = 'output window, operand 0, single buffered']
    %10 = vsyncpa [#allocation8], 0
    %11 = vsyncpa [#allocation11], 0
    %12 = vsyncpa [#allocation9], 0
    // Predicated region
    $region2: #{tpu_custom_call.1} parent=1 // pred_check
      _
    $region3: #{tpu_custom_call.1} parent=1 // pred_check_branch
      %14 = sbr.rel (0) target = $region5
    $region4: #{tpu_custom_call.1} parent=1 // pred_region
      %s16 = ssub.s32 1024, 1024
      %17 = vsyncadd [#allocation8], %s16
      %s18 = sshll.u32 [#allocation7], 4
      %s19 = int_to_ptr.vmem [resolvable:$true] %s18
      %24 = dma.hbm_to_vmem [thread:$0]  %s0, 1024, %s19, [#allocation8], 128, 128, 8
    $region5: #{tpu_custom_call.1} parent=1 // pred_fallthru
      _
    // Predicated region
    $region6: #{tpu_custom_call.1} parent=1 // pred_check
      _
    $region7: #{tpu_custom_call.1} parent=1 // pred_check_branch
      %26 = sbr.rel (0) target = $region9
    $region8: #{tpu_custom_call.1} parent=1 // pred_region
      %s28 = ssub.s32 256, 256
      %29 = vsyncadd [#allocation11], %s28
      %s30 = sshll.u32 [#allocation10], 4
      %s31 = int_to_ptr.vmem [resolvable:$true] %s30
      %36 = dma.hbm_to_vmem [thread:$0]  %s1, 256, %s31, [#allocation11], 128, 128, 8
    $region9: #{tpu_custom_call.1} parent=1 // pred_fallthru
      _
    // Predicated region
    $region10: #{tpu_custom_call.1} parent=1 // pred_check
      _
    $region11: #{tpu_custom_call.1} parent=1 // pred_check_branch
      %38 = sbr.rel (0) target = $region13
    $region12: #{tpu_custom_call.1} parent=1 // pred_region
      _
    $region13: #{tpu_custom_call.1} parent=1 // pred_fallthru
      _
    // Predicated region
    $region14: #{tpu_custom_call.1} parent=1 // pred_check
      _
    $region15: #{tpu_custom_call.1} parent=1 // pred_check_branch
      %40 = sbr.rel (0) target = $region17
    $region16: #{tpu_custom_call.1} parent=1 // pred_region
      %s42 = ssub.s32 2048, 2048
      %43 = vsyncadd [#allocation11], %s42
      %s44 = sshll.u32 [#allocation12], 4
      %s45 = int_to_ptr.vmem [resolvable:$true] %s44
      %50 = dma.hbm_to_vmem [thread:$0]  %s3, 2048, %s45, [#allocation11], 128, 128, 8
    $region17: #{tpu_custom_call.1} parent=1 // pred_fallthru
      _
    // Predicated region
    $region18: #{tpu_custom_call.1} parent=1 // pred_check
      _
    $region19: #{tpu_custom_call.1} parent=1 // pred_check_branch
      %52 = sbr.rel (0) target = $region21
    $region20: #{tpu_custom_call.1} parent=1 // pred_region
      _
    $region21: #{tpu_custom_call.1} parent=1 // pred_fallthru
      _
    // Predicated region
    $region22: #{tpu_custom_call.1} parent=1 // pred_check
      _
    $region23: #{tpu_custom_call.1} parent=1 // pred_check_branch
      %54 = sbr.rel (0) target = $region25
    $region24: #{tpu_custom_call.1} parent=1 // pred_region
      %55 = dma.done [#allocation8], 1024
    $region25: #{tpu_custom_call.1} parent=1 // pred_fallthru
      _
    // Predicated region
    $region26: #{tpu_custom_call.1} parent=1 // pred_check
      _
    $region27: #{tpu_custom_call.1} parent=1 // pred_check_branch
      %57 = sbr.rel (0) target = $region29
    $region28: #{tpu_custom_call.1} parent=1 // pred_region
      %58 = dma.done [#allocation11], 256
    $region29: #{tpu_custom_call.1} parent=1 // pred_fallthru
      _
    // Predicated region
    $region30: #{tpu_custom_call.1} parent=1 // pred_check
      _
    $region31: #{tpu_custom_call.1} parent=1 // pred_check_branch
      %60 = sbr.rel (0) target = $region33
    $region32: #{tpu_custom_call.1} parent=1 // pred_region
      %61 = dma.done [#allocation11], 2048
    $region33: #{tpu_custom_call.1} parent=1 // pred_fallthru
      _
    %p62 = scmp.eq.s32.totalorder 0, 0
    // Predicated region
    $region34: #{tpu_custom_call.1} parent=1 // pred_check
      %p63 = pneg %p62
    $region35: #{tpu_custom_call.1} parent=1 // pred_check_branch
      %65 = sbr.rel (%p63) target = $region37
    $region36: #{tpu_custom_call.1} parent=1 // pred_region
      %66 = vst [vmem:[#allocation2] sm:$0xff] 0.0
      %67 = vst [vmem:[#allocation3] sm:$0xff] 0.0
      %68 = vst [vmem:[#allocation4] sm:$0xff] 0.0
      %69 = vst [vmem:[#allocation5] sm:$0xff] 0.0
    $region37: #{tpu_custom_call.1} parent=1 // pred_fallthru
      _
    %v70 = vld [vmem:[#allocation7] sm:$0xff]
    %v71 = vld [vmem:[#allocation7 + $0x8] sm:$0xff]
    %v72 = vld [vmem:[#allocation7 + $0x10] sm:$0xff]
    %v73 = vld [vmem:[#allocation7 + $0x18] sm:$0xff]
    %v74 = vld [vmem:[#allocation7 + $0x20] sm:$0xff]
    %v75 = vld [vmem:[#allocation7 + $0x28] sm:$0xff]
    %v76 = vld [vmem:[#allocation7 + $0x30] sm:$0xff]
    %v77 = vld [vmem:[#allocation7 + $0x38] sm:$0xff]
    %v78 = vld [vmem:[#allocation10] sm:$0xff]
    %v79 = vld [vmem:[#allocation10 + $0x8] sm:$0xff]
    %v80 = vld [vmem:[%s2] sm:$0x1]
    %v82 = vlaneseq
    %v83 = vshrl.u32 %v82, 7
    %v84 = vsub.s32 0, %v83
    %v85 = vrot.slane %v80, %v84
    %vm87 = vcmask 130048
    %v89 = vsel %vm87, %v70, 0
    %v92 = vsel %vm87, %v71, 0
    %v95 = vsel %vm87, %v72, 0
    %v98 = vsel %vm87, %v73, 0
    %v101 = vsel %vm87, %v74, 0
    %v104 = vsel %vm87, %v75, 0
    %v107 = vsel %vm87, %v76, 0
    %v110 = vsel %vm87, %v77, 0
    %112 = vmatprep.subr.mxu0 0.0
    %113 = vmatpush1.msra.mxu0 %v78
    %114 = vmatprep.subr.mxu0 0.0
    %115 = vmatpush1.msra.mxu0 %v79
    %116 = vmatprep.subr.mxu0 0.0
    %117 = vmatpush1.msra.mxu0 0.0
    %118 = vmatprep.subr.mxu0 0.0
    %119 = vmatpush1.msra.mxu0 0.0
    %120 = vmatprep.subr.mxu0 0.0
    %121 = vmatpush1.msra.mxu0 0.0
    %122 = vmatprep.subr.mxu0 0.0
    %123 = vmatpush1.msra.mxu0 0.0
    %124 = vmatprep.subr.mxu0 0.0
    %125 = vmatpush1.msra.mxu0 0.0
    %126 = vmatprep.subr.mxu0 0.0
    %127 = vmatpush1.msra.mxu0 0.0
    %128 = vmatprep.subr.mxu0 0.0
    %129 = vmatpush1.msra.mxu0 0.0
    %130 = vmatprep.subr.mxu0 0.0
    %131 = vmatpush1.msra.mxu0 0.0
    %132 = vmatprep.subr.mxu0 0.0
    %133 = vmatpush1.msra.mxu0 0.0
    %134 = vmatprep.subr.mxu0 0.0
    %135 = vmatpush1.msra.mxu0 0.0
    %136 = vmatprep.subr.mxu0 0.0
    %137 = vmatpush1.msra.mxu0 0.0
    %138 = vmatprep.subr.mxu0 0.0
    %139 = vmatpush1.msra.mxu0 0.0
    %140 = vmatprep.subr.mxu0 0.0
    %141 = vmatpush1.msra.mxu0 0.0
    %142 = vmatprep.subr.mxu0 0.0
    %143 = vmatpush1.msra.mxu0 0.0
    %144 = vmatprep.subr.mxu0 0.0
    %145 = vmatpush1.msra.mxu0 0.0
    %146 = vmatprep.subr.mxu0 0.0
    %147 = vmatpush1.msra.mxu0 0.0
    %148 = vmatprep.subr.mxu0 0.0
    %149 = vmatpush1.msra.mxu0 0.0
    %150 = vmatprep.subr.mxu0 0.0
    %151 = vmatpush1.msra.mxu0 0.0
    %152 = vmatprep.subr.mxu0 0.0
    %153 = vmatpush1.msra.mxu0 0.0
    %154 = vmatprep.subr.mxu0 0.0
    %155 = vmatpush1.msra.mxu0 0.0
    %156 = vmatprep.subr.mxu0 0.0
    %157 = vmatpush1.msra.mxu0 0.0
    %158 = vmatprep.subr.mxu0 0.0
    %159 = vmatpush1.msra.mxu0 0.0
    %160 = vmatprep.subr.mxu0 0.0
    %161 = vmatpush1.msra.mxu0 0.0
    %162 = vmatprep.subr.mxu0 0.0
    %163 = vmatpush1.msra.mxu0 0.0
    %164 = vmatprep.subr.mxu0 0.0
    %165 = vmatpush1.msra.mxu0 0.0
    %166 = vmatprep.subr.mxu0 0.0
    %167 = vmatpush1.msra.mxu0 0.0
    %168 = vmatprep.subr.mxu0 0.0
    %169 = vmatpush1.msra.mxu0 0.0
    %170 = vmatprep.subr.mxu0 0.0
    %171 = vmatpush1.msra.mxu0 0.0
    %172 = vmatprep.subr.mxu0 0.0
    %173 = vmatpush1.msra.mxu0 0.0
    %174 = vmatprep.subr.mxu0 0.0
    %175 = vmatpush1.msra.mxu0 0.0
    %176 = vmatprep.mubr.f32.mxu0 0.0
    %177 = vmatmul.mubr.f32.gmra.mrb[0].mxu0 %v89
    %v178 = vpop.f32.mrb[0].mxu0
    %v179 = vadd.f32 %v85, %v178
    %v180 = vpop.f32.mrb[0].mxu0
    %181 = vmatprep.mubr.f32.mxu0 0.0
    %182 = vmatmul.mubr.f32.gmra.mrb[0].mxu0 %v92
    %v183 = vpop.f32.mrb[0].mxu0
    %v184 = vadd.f32 %v85, %v183
    %v185 = vpop.f32.mrb[0].mxu0
    %186 = vmatprep.mubr.f32.mxu0 0.0
    %187 = vmatmul.mubr.f32.gmra.mrb[0].mxu0 %v95
    %v188 = vpop.f32.mrb[0].mxu0
    %v189 = vadd.f32 %v85, %v188
    %v190 = vpop.f32.mrb[0].mxu0
    %191 = vmatprep.mubr.f32.mxu0 0.0
    %192 = vmatmul.mubr.f32.gmra.mrb[0].mxu0 %v98
    %v193 = vpop.f32.mrb[0].mxu0
    %v194 = vadd.f32 %v85, %v193
    %v195 = vpop.f32.mrb[0].mxu0
    %196 = vmatprep.mubr.f32.mxu0 0.0
    %197 = vmatmul.mubr.f32.gmra.mrb[0].mxu0 %v101
    %v198 = vpop.f32.mrb[0].mxu0
    %v199 = vadd.f32 %v85, %v198
    %v200 = vpop.f32.mrb[0].mxu0
    %201 = vmatprep.mubr.f32.mxu0 0.0
    %202 = vmatmul.mubr.f32.gmra.mrb[0].mxu0 %v104
    %v203 = vpop.f32.mrb[0].mxu0
    %v204 = vadd.f32 %v85, %v203
    %v205 = vpop.f32.mrb[0].mxu0
    %206 = vmatprep.mubr.f32.mxu0 0.0
    %207 = vmatmul.mubr.f32.gmra.mrb[0].mxu0 %v107
    %v208 = vpop.f32.mrb[0].mxu0
    %v209 = vadd.f32 %v85, %v208
    %v210 = vpop.f32.mrb[0].mxu0
    %211 = vmatprep.mubr.f32.mxu0 0.0
    %212 = vmatmul.mubr.f32.gmra.mrb[0].mxu0 %v110
    %v213 = vpop.f32.mrb[0].mxu0
    %v214 = vadd.f32 %v85, %v213
    %v215 = vpop.f32.mrb[0].mxu0
    %216 = vdwg.mxu0
    %217 = vst [vmem:[#allocation6] sm:$0xff] %v179
    %218 = vst [vmem:[#allocation6 + $0x8] sm:$0xff] %v184
    %219 = vst [vmem:[#allocation6 + $0x10] sm:$0xff] %v189
    %220 = vst [vmem:[#allocation6 + $0x18] sm:$0xff] %v194
    %221 = vst [vmem:[#allocation6 + $0x20] sm:$0xff] %v199
    %222 = vst [vmem:[#allocation6 + $0x28] sm:$0xff] %v204
    %223 = vst [vmem:[#allocation6 + $0x30] sm:$0xff] %v209
    %224 = vst [vmem:[#allocation6 + $0x38] sm:$0xff] %v214
    %v225 = vld [vmem:[#allocation2] sm:$0xff]
    %v226 = vld [vmem:[#allocation3] sm:$0xff]
    %v227 = vmul.f32 %v225, 0.36787945
    %v228 = vld [vmem:[#allocation6] sm:$0xff]
    %v229 = vadd.f32 %v227, %v228
    %v230 = vmul.f32 %v226, 0.60653067
    %v231 = vadd.f32 %v230, %v229
    %vm232 = vcmp.gt.f32.partialorder %v231, 1.0
    %v233 = vsel %vm232, 1.0, 0.0
    %234 = vst [vmem:[#allocation6] sm:$0xff] %v233
    %v235 = vsel %vm232, 0.0, %v231
    %v236 = vmul.f32 %v229, 0.36787945
    %s237 = scalar_lea.vmem [#allocation6], 8
    %v238 = vld [vmem:[%s237] sm:$0xff]
    %v239 = vadd.f32 %v236, %v238
    %v240 = vmul.f32 %v235, 0.60653067
    %v241 = vadd.f32 %v240, %v239
    %vm242 = vcmp.gt.f32.partialorder %v241, 1.0
    %v243 = vsel %vm242, 1.0, 0.0
    %244 = vst [vmem:[%s237] sm:$0xff] %v243
    %v245 = vsel %vm242, 0.0, %v241
    %v246 = vmul.f32 %v239, 0.36787945
    %s247 = scalar_lea.vmem [#allocation6], 16
    %v248 = vld [vmem:[%s247] sm:$0xff]
    %v249 = vadd.f32 %v246, %v248
    %v250 = vmul.f32 %v245, 0.60653067
    %v251 = vadd.f32 %v250, %v249
    %vm252 = vcmp.gt.f32.partialorder %v251, 1.0
    %v253 = vsel %vm252, 1.0, 0.0
    %254 = vst [vmem:[%s247] sm:$0xff] %v253
    %v255 = vsel %vm252, 0.0, %v251
    %v256 = vmul.f32 %v249, 0.36787945
    %s257 = scalar_lea.vmem [#allocation6], 24
    %v258 = vld [vmem:[%s257] sm:$0xff]
    %v259 = vadd.f32 %v256, %v258
    %v260 = vmul.f32 %v255, 0.60653067
    %v261 = vadd.f32 %v260, %v259
    %vm262 = vcmp.gt.f32.partialorder %v261, 1.0
    %v263 = vsel %vm262, 1.0, 0.0
    %264 = vst [vmem:[%s257] sm:$0xff] %v263
    %v265 = vsel %vm262, 0.0, %v261
    %v266 = vmul.f32 %v259, 0.36787945
    %s267 = scalar_lea.vmem [#allocation6], 32
    %v268 = vld [vmem:[%s267] sm:$0xff]
    %v269 = vadd.f32 %v266, %v268
    %v270 = vmul.f32 %v265, 0.60653067
    %v271 = vadd.f32 %v270, %v269
    %vm272 = vcmp.gt.f32.partialorder %v271, 1.0
    %v273 = vsel %vm272, 1.0, 0.0
    %274 = vst [vmem:[%s267] sm:$0xff] %v273
    %v275 = vsel %vm272, 0.0, %v271
    %v276 = vmul.f32 %v269, 0.36787945
    %s277 = scalar_lea.vmem [#allocation6], 40
    %v278 = vld [vmem:[%s277] sm:$0xff]
    %v279 = vadd.f32 %v276, %v278
    %v280 = vmul.f32 %v275, 0.60653067
    %v281 = vadd.f32 %v280, %v279
    %vm282 = vcmp.gt.f32.partialorder %v281, 1.0
    %v283 = vsel %vm282, 1.0, 0.0
    %284 = vst [vmem:[%s277] sm:$0xff] %v283
    %v285 = vsel %vm282, 0.0, %v281
    %v286 = vmul.f32 %v279, 0.36787945
    %s287 = scalar_lea.vmem [#allocation6], 48
    %v288 = vld [vmem:[%s287] sm:$0xff]
    %v289 = vadd.f32 %v286, %v288
    %v290 = vmul.f32 %v285, 0.60653067
    %v291 = vadd.f32 %v290, %v289
    %vm292 = vcmp.gt.f32.partialorder %v291, 1.0
    %v293 = vsel %vm292, 1.0, 0.0
    %294 = vst [vmem:[%s287] sm:$0xff] %v293
    %v295 = vsel %vm292, 0.0, %v291
    %v296 = vmul.f32 %v289, 0.36787945
    %s297 = scalar_lea.vmem [#allocation6], 56
    %v298 = vld [vmem:[%s297] sm:$0xff]
    %v299 = vadd.f32 %v296, %v298
    %v300 = vmul.f32 %v295, 0.60653067
    %v301 = vadd.f32 %v300, %v299
    %vm302 = vcmp.gt.f32.partialorder %v301, 1.0
    %v303 = vsel %vm302, 1.0, 0.0
    %304 = vst [vmem:[%s297] sm:$0xff] %v303
    %v305 = vsel %vm302, 0.0, %v301
    %306 = vst [vmem:[#allocation2] sm:$0xff] %v299
    %307 = vst [vmem:[#allocation3] sm:$0xff] %v305
    %v308 = vld [vmem:[#allocation6] sm:$0xff]
    %v309 = vld [vmem:[#allocation6 + $0x8] sm:$0xff]
    %v310 = vld [vmem:[#allocation6 + $0x10] sm:$0xff]
    %v311 = vld [vmem:[#allocation6 + $0x18] sm:$0xff]
    %v312 = vld [vmem:[#allocation6 + $0x20] sm:$0xff]
    %v313 = vld [vmem:[#allocation6 + $0x28] sm:$0xff]
    %v314 = vld [vmem:[#allocation6 + $0x30] sm:$0xff]
    %v315 = vld [vmem:[#allocation6 + $0x38] sm:$0xff]
    %v316 = vld [vmem:[#allocation12] sm:$0xff]
    %v317 = vld [vmem:[#allocation12 + $0x8] sm:$0xff]
    %v318 = vld [vmem:[#allocation12 + $0x10] sm:$0xff]
    %v319 = vld [vmem:[#allocation12 + $0x18] sm:$0xff]
    %v320 = vld [vmem:[#allocation12 + $0x20] sm:$0xff]
    %v321 = vld [vmem:[#allocation12 + $0x28] sm:$0xff]
    %v322 = vld [vmem:[#allocation12 + $0x30] sm:$0xff]
    %v323 = vld [vmem:[#allocation12 + $0x38] sm:$0xff]
    %v324 = vld [vmem:[#allocation12 + $0x40] sm:$0xff]
    %v325 = vld [vmem:[#allocation12 + $0x48] sm:$0xff]
    %v326 = vld [vmem:[#allocation12 + $0x50] sm:$0xff]
    %v327 = vld [vmem:[#allocation12 + $0x58] sm:$0xff]
    %v328 = vld [vmem:[#allocation12 + $0x60] sm:$0xff]
    %v329 = vld [vmem:[#allocation12 + $0x68] sm:$0xff]
    %v330 = vld [vmem:[#allocation12 + $0x70] sm:$0xff]
    %v331 = vld [vmem:[#allocation12 + $0x78] sm:$0xff]
    %v332 = vld [vmem:[%s4] sm:$0x1]
    %v334 = vlaneseq
    %v335 = vshrl.u32 %v334, 7
    %v336 = vsub.s32 0, %v335
    %v337 = vrot.slane %v332, %v336
    %339 = vmatprep.subr.mxu0 0.0
    %340 = vmatpush1.msra.mxu0 %v316
    %341 = vmatprep.subr.mxu0 0.0
    %342 = vmatpush1.msra.mxu0 %v317
    %343 = vmatprep.subr.mxu0 0.0
    %344 = vmatpush1.msra.mxu0 %v318
    %345 = vmatprep.subr.mxu0 0.0
    %346 = vmatpush1.msra.mxu0 %v319
    %347 = vmatprep.subr.mxu0 0.0
    %348 = vmatpush1.msra.mxu0 %v320
    %349 = vmatprep.subr.mxu0 0.0
    %350 = vmatpush1.msra.mxu0 %v321
    %351 = vmatprep.subr.mxu0 0.0
    %352 = vmatpush1.msra.mxu0 %v322
    %353 = vmatprep.subr.mxu0 0.0
    %354 = vmatpush1.msra.mxu0 %v323
    %355 = vmatprep.subr.mxu0 0.0
    %356 = vmatpush1.msra.mxu0 %v324
    %357 = vmatprep.subr.mxu0 0.0
    %358 = vmatpush1.msra.mxu0 %v325
    %359 = vmatprep.subr.mxu0 0.0
    %360 = vmatpush1.msra.mxu0 %v326
    %361 = vmatprep.subr.mxu0 0.0
    %362 = vmatpush1.msra.mxu0 %v327
    %363 = vmatprep.subr.mxu0 0.0
    %364 = vmatpush1.msra.mxu0 %v328
    %365 = vmatprep.subr.mxu0 0.0
    %366 = vmatpush1.msra.mxu0 %v329
    %367 = vmatprep.subr.mxu0 0.0
    %368 = vmatpush1.msra.mxu0 %v330
    %369 = vmatprep.subr.mxu0 0.0
    %370 = vmatpush1.msra.mxu0 %v331
    %371 = vmatprep.subr.mxu0 0.0
    %372 = vmatpush1.msra.mxu0 0.0
    %373 = vmatprep.subr.mxu0 0.0
    %374 = vmatpush1.msra.mxu0 0.0
    %375 = vmatprep.subr.mxu0 0.0
    %376 = vmatpush1.msra.mxu0 0.0
    %377 = vmatprep.subr.mxu0 0.0
    %378 = vmatpush1.msra.mxu0 0.0
    %379 = vmatprep.subr.mxu0 0.0
    %380 = vmatpush1.msra.mxu0 0.0
    %381 = vmatprep.subr.mxu0 0.0
    %382 = vmatpush1.msra.mxu0 0.0
    %383 = vmatprep.subr.mxu0 0.0
    %384 = vmatpush1.msra.mxu0 0.0
    %385 = vmatprep.subr.mxu0 0.0
    %386 = vmatpush1.msra.mxu0 0.0
    %387 = vmatprep.subr.mxu0 0.0
    %388 = vmatpush1.msra.mxu0 0.0
    %389 = vmatprep.subr.mxu0 0.0
    %390 = vmatpush1.msra.mxu0 0.0
    %391 = vmatprep.subr.mxu0 0.0
    %392 = vmatpush1.msra.mxu0 0.0
    %393 = vmatprep.subr.mxu0 0.0
    %394 = vmatpush1.msra.mxu0 0.0
    %395 = vmatprep.subr.mxu0 0.0
    %396 = vmatpush1.msra.mxu0 0.0
    %397 = vmatprep.subr.mxu0 0.0
    %398 = vmatpush1.msra.mxu0 0.0
    %399 = vmatprep.subr.mxu0 0.0
    %400 = vmatpush1.msra.mxu0 0.0
    %401 = vmatprep.subr.mxu0 0.0
    %402 = vmatpush1.msra.mxu0 0.0
    %403 = vmatprep.mubr.f32.mxu0 0.0
    %404 = vmatmul.mubr.f32.gmra.mrb[0].mxu0 %v308
    %v405 = vpop.f32.mrb[0].mxu0
    %v406 = vadd.f32 %v337, %v405
    %v407 = vpop.f32.mrb[0].mxu0
    %408 = vmatprep.mubr.f32.mxu0 0.0
    %409 = vmatmul.mubr.f32.gmra.mrb[0].mxu0 %v309
    %v410 = vpop.f32.mrb[0].mxu0
    %v411 = vadd.f32 %v337, %v410
    %v412 = vpop.f32.mrb[0].mxu0
    %413 = vmatprep.mubr.f32.mxu0 0.0
    %414 = vmatmul.mubr.f32.gmra.mrb[0].mxu0 %v310
    %v415 = vpop.f32.mrb[0].mxu0
    %v416 = vadd.f32 %v337, %v415
    %v417 = vpop.f32.mrb[0].mxu0
    %418 = vmatprep.mubr.f32.mxu0 0.0
    %419 = vmatmul.mubr.f32.gmra.mrb[0].mxu0 %v311
    %v420 = vpop.f32.mrb[0].mxu0
    %v421 = vadd.f32 %v337, %v420
    %v422 = vpop.f32.mrb[0].mxu0
    %423 = vmatprep.mubr.f32.mxu0 0.0
    %424 = vmatmul.mubr.f32.gmra.mrb[0].mxu0 %v312
    %v425 = vpop.f32.mrb[0].mxu0
    %v426 = vadd.f32 %v337, %v425
    %v427 = vpop.f32.mrb[0].mxu0
    %428 = vmatprep.mubr.f32.mxu0 0.0
    %429 = vmatmul.mubr.f32.gmra.mrb[0].mxu0 %v313
    %v430 = vpop.f32.mrb[0].mxu0
    %v431 = vadd.f32 %v337, %v430
    %v432 = vpop.f32.mrb[0].mxu0
    %433 = vmatprep.mubr.f32.mxu0 0.0
    %434 = vmatmul.mubr.f32.gmra.mrb[0].mxu0 %v314
    %v435 = vpop.f32.mrb[0].mxu0
    %v436 = vadd.f32 %v337, %v435
    %v437 = vpop.f32.mrb[0].mxu0
    %438 = vmatprep.mubr.f32.mxu0 0.0
    %439 = vmatmul.mubr.f32.gmra.mrb[0].mxu0 %v315
    %v440 = vpop.f32.mrb[0].mxu0
    %v441 = vadd.f32 %v337, %v440
    %v442 = vpop.f32.mrb[0].mxu0
    %443 = vdwg.mxu0
    %444 = vst [vmem:[#allocation13] sm:$0xff] %v406
    %445 = vst [vmem:[#allocation13 + $0x8] sm:$0xff] %v411
    %446 = vst [vmem:[#allocation13 + $0x10] sm:$0xff] %v416
    %447 = vst [vmem:[#allocation13 + $0x18] sm:$0xff] %v421
    %448 = vst [vmem:[#allocation13 + $0x20] sm:$0xff] %v426
    %449 = vst [vmem:[#allocation13 + $0x28] sm:$0xff] %v431
    %450 = vst [vmem:[#allocation13 + $0x30] sm:$0xff] %v436
    %451 = vst [vmem:[#allocation13 + $0x38] sm:$0xff] %v441
    %v452 = vld [vmem:[#allocation4] sm:$0xff]
    %v453 = vld [vmem:[#allocation5] sm:$0xff]
    %v454 = vmul.f32 %v452, 0.36787945
    %v455 = vld [vmem:[#allocation13] sm:$0xff]
    %v456 = vadd.f32 %v454, %v455
    %v457 = vmul.f32 %v453, 0.9048374
    %v458 = vadd.f32 %v457, %v456
    %459 = vst [vmem:[#allocation13] sm:$0xff] %v458
    %vm460 = vcmp.gt.f32.partialorder %v458, 1.0
    %v461 = vsel %vm460, 0.0, %v458
    %v462 = vmul.f32 %v456, 0.36787945
    %s463 = scalar_lea.vmem [#allocation13], 8
    %v464 = vld [vmem:[%s463] sm:$0xff]
    %v465 = vadd.f32 %v462, %v464
    %v466 = vmul.f32 %v461, 0.9048374
    %v467 = vadd.f32 %v466, %v465
    %468 = vst [vmem:[%s463] sm:$0xff] %v467
    %vm469 = vcmp.gt.f32.partialorder %v467, 1.0
    %v470 = vsel %vm469, 0.0, %v467
    %v471 = vmul.f32 %v465, 0.36787945
    %s472 = scalar_lea.vmem [#allocation13], 16
    %v473 = vld [vmem:[%s472] sm:$0xff]
    %v474 = vadd.f32 %v471, %v473
    %v475 = vmul.f32 %v470, 0.9048374
    %v476 = vadd.f32 %v475, %v474
    %477 = vst [vmem:[%s472] sm:$0xff] %v476
    %vm478 = vcmp.gt.f32.partialorder %v476, 1.0
    %v479 = vsel %vm478, 0.0, %v476
    %v480 = vmul.f32 %v474, 0.36787945
    %s481 = scalar_lea.vmem [#allocation13], 24
    %v482 = vld [vmem:[%s481] sm:$0xff]
    %v483 = vadd.f32 %v480, %v482
    %v484 = vmul.f32 %v479, 0.9048374
    %v485 = vadd.f32 %v484, %v483
    %486 = vst [vmem:[%s481] sm:$0xff] %v485
    %vm487 = vcmp.gt.f32.partialorder %v485, 1.0
    %v488 = vsel %vm487, 0.0, %v485
    %v489 = vmul.f32 %v483, 0.36787945
    %s490 = scalar_lea.vmem [#allocation13], 32
    %v491 = vld [vmem:[%s490] sm:$0xff]
    %v492 = vadd.f32 %v489, %v491
    %v493 = vmul.f32 %v488, 0.9048374
    %v494 = vadd.f32 %v493, %v492
    %495 = vst [vmem:[%s490] sm:$0xff] %v494
    %vm496 = vcmp.gt.f32.partialorder %v494, 1.0
    %v497 = vsel %vm496, 0.0, %v494
    %v498 = vmul.f32 %v492, 0.36787945
    %s499 = scalar_lea.vmem [#allocation13], 40
    %v500 = vld [vmem:[%s499] sm:$0xff]
    %v501 = vadd.f32 %v498, %v500
    %v502 = vmul.f32 %v497, 0.9048374
    %v503 = vadd.f32 %v502, %v501
    %504 = vst [vmem:[%s499] sm:$0xff] %v503
    %vm505 = vcmp.gt.f32.partialorder %v503, 1.0
    %v506 = vsel %vm505, 0.0, %v503
    %v507 = vmul.f32 %v501, 0.36787945
    %s508 = scalar_lea.vmem [#allocation13], 48
    %v509 = vld [vmem:[%s508] sm:$0xff]
    %v510 = vadd.f32 %v507, %v509
    %v511 = vmul.f32 %v506, 0.9048374
    %v512 = vadd.f32 %v511, %v510
    %513 = vst [vmem:[%s508] sm:$0xff] %v512
    %vm514 = vcmp.gt.f32.partialorder %v512, 1.0
    %v515 = vsel %vm514, 0.0, %v512
    %v516 = vmul.f32 %v510, 0.36787945
    %s517 = scalar_lea.vmem [#allocation13], 56
    %v518 = vld [vmem:[%s517] sm:$0xff]
    %v519 = vadd.f32 %v516, %v518
    %v520 = vmul.f32 %v515, 0.9048374
    %v521 = vadd.f32 %v520, %v519
    %522 = vst [vmem:[%s517] sm:$0xff] %v521
    %vm523 = vcmp.gt.f32.partialorder %v521, 1.0
    %v524 = vsel %vm523, 0.0, %v521
    %525 = vst [vmem:[#allocation4] sm:$0xff] %v519
    %526 = vst [vmem:[#allocation5] sm:$0xff] %v524
    // Predicated region
    $region38: #{tpu_custom_call.1} parent=1 // pred_check
      _
    $region39: #{tpu_custom_call.1} parent=1 // pred_check_branch
      %528 = sbr.rel (0) target = $region41
    $region40: #{tpu_custom_call.1} parent=1 // pred_region
      %s530 = ssub.s32 1024, 1024
      %531 = vsyncadd [#allocation9], %s530
      %s532 = sshll.u32 [#allocation13], 4
      %s533 = int_to_ptr.vmem [resolvable:$true] %s532
      %538 = dma.vmem_to_hbm [thread:$0]  %s533, 1024, %s5, [#allocation9], 128, 128, 8
    $region41: #{tpu_custom_call.1} parent=1 // pred_fallthru
      _
    // Predicated region
    $region42: #{tpu_custom_call.1} parent=1 // pred_check
      _
    $region43: #{tpu_custom_call.1} parent=1 // pred_check_branch
      %540 = sbr.rel (0) target = $region45
    $region44: #{tpu_custom_call.1} parent=1 // pred_region
      %541 = dma.done [#allocation9], 1024
    $region45: #{tpu_custom_call.1} parent=1 // pred_fallthru
      _
    %542 = vsyncpa [#allocation8], 1
    %543 = vsyncpa [#allocation11], 1
    %544 = vsyncpa [#allocation9], 1

</llo_original>
